<compile_context>
chip_gen: v6e
topology: v6e:2x2x1
jax: 0.10.0
libtpu: 0.0.40
codegen_flags: <defaults>
</compile_context>

<pallas_src>
import functools

import jax
import jax.numpy as jnp
from jax.experimental import pallas as pl
from jax.experimental.pallas import tpu as pltpu


def _gru_recurrence_kernel(gi_ref, whh_ref, bhh_ref, h_ref, *,
                           chunk_len, total_len, padded_len, unroll):
    """One T-chunk of the serial GRU recurrence for one batch tile.

    gi_ref  : (Tc, Bt, 3*Hl) f32  precomputed input projections (+ folded biases),
                                  gate g occupying lanes [g*Hl, g*Hl + H).
    whh_ref : (Hl, 3*Hl)     f32  fused hidden weights: gh = h @ whh (lane-aligned gates).
    bhh_ref : (1, 3*Hl)      f32  b_hh_n on the n-gate lanes, zeros elsewhere
                                  (cannot be folded into gi: it is multiplied by r).
    h_ref   : (Bt, Hl)       f32  output block == resident hidden-state accumulator.
    """
    c = pl.program_id(1)                     # T-chunk index (axis 0 is the batch tile)

    @pl.when(c == 0)
    def _():
        h_ref[...] = jnp.zeros_like(h_ref)   # h0 = 0

    Bt, Hl = h_ref.shape
    # Hoisted out of the serial loop: JAX does not CSE broadcast_in_dim, so doing this
    # inside the (unrolled) loop would emit one broadcast per unrolled iteration.
    bhh_b = jnp.broadcast_to(bhh_ref[...], (Bt, 3 * Hl))

    def step(tt, h):
        pre = gi_ref[tt]                                              # (Bt, 3Hl) VMEM load
        # Single fused MXU call per serial step; gate blocks at lane offsets 0, Hl, 2Hl.
        gh = jnp.dot(h, whh_ref[...], preferred_element_type=jnp.float32) + bhh_b
        rz = jax.nn.sigmoid(pre[:, :2 * Hl] + gh[:, :2 * Hl])
        r, z = rz[:, :Hl], rz[:, Hl:]
        n = jnp.tanh(pre[:, 2 * Hl:] + r * gh[:, 2 * Hl:])
        h_new = n + z * (h - n)                                       # == (1 - z) * n + z * h
        if padded_len != total_len:                                   # last chunk may be partial
            h_new = jnp.where(c * chunk_len + tt < total_len, h_new, h)
        return h_new

    # h stays in vregs across the whole chunk; exactly one VMEM store per chunk.
    h_ref[...] = jax.lax.fori_loop(0, chunk_len, step, h_ref[...], unroll=unroll)


@jax.jit
def recurrent_encoder_forward(x_btf, params):
    """x_btf: (B, T, F) float32 (batch_first, like PyTorch). Returns h_n of shape (1, B, H)."""
    w_ih, w_hh, b_ih, b_hh = params
    B, T, F = x_btf.shape
    H = w_hh.shape[1]                                   # w_hh: (3H, H)

    # ---- layout constants -------------------------------------------------------------
    Hl = ((H + 127) // 128) * 128                       # lane-aligned per-gate width
    K = 3 * Hl                                          # fused gate width

    # Batch padding; split into 2 tiles on a "parallel" grid axis when big enough so that
    # v7x's two TensorCores each run an independent batch shard of the recurrence.
    if B >= 16:
        Bt = ((pl.cdiv(B, 2) + 7) // 8) * 8
        num_btiles = 2
    else:
        Bt = max(8, ((B + 7) // 8) * 8)
        num_btiles = 1
    Bp = Bt * num_btiles

    # ---- gate-major, lane-padded fused weights / biases (one-time layout work) ---------
    wih_g = w_ih.reshape(3, H, F)                       # [r, z, n]
    whh_g = w_hh.reshape(3, H, H)
    bih_g = b_ih.reshape(3, H)
    bhh_g = b_hh.reshape(3, H)

    wih_fused = jnp.zeros((F, K), jnp.float32)          # gi = x @ wih_fused
    whh_fused = jnp.zeros((Hl, K), jnp.float32)         # gh = h @ whh_fused
    for g in range(3):
        lo = g * Hl
        wih_fused = wih_fused.at[:, lo:lo + H].set(wih_g[g].T)
        whh_fused = whh_fused.at[:H, lo:lo + H].set(whh_g[g].T)
    # r/z gates: both biases fold into gi; n gate: only b_ih folds (b_hh_n is scaled by r).
    gi_bias = jnp.zeros((K,), jnp.float32)
    gi_bias = gi_bias.at[0 * Hl:0 * Hl + H].set(bih_g[0] + bhh_g[0])
    gi_bias = gi_bias.at[1 * Hl:1 * Hl + H].set(bih_g[1] + bhh_g[1])
    gi_bias = gi_bias.at[2 * Hl:2 * Hl + H].set(bih_g[2])
    bhh_fused = jnp.zeros((1, K), jnp.float32)
    bhh_fused = bhh_fused.at[0, 2 * Hl:2 * Hl + H].set(bhh_g[2])

    # ---- hoisted input projection for ALL timesteps: one big natural-layout matmul -----
    # Only the small x is transposed to time-major; gi comes out of the matmul already in
    # the (T, Bp, K) layout the kernel consumes (no transpose of the largest array).
    x_tbf = jnp.transpose(x_btf, (1, 0, 2))
    x_tbf = jnp.pad(x_tbf, ((0, 0), (0, Bp - B), (0, 0)))
    gi = jnp.einsum('tbf,fk->tbk', x_tbf, wih_fused,
                    preferred_element_type=jnp.float32,
                    precision=jax.lax.Precision.HIGHEST)
    gi = gi + gi_bias[None, None, :]

    # ---- chunk T so only ~2 chunks of gi live in VMEM (sized for v7x's 64 MiB VMEM) ----
    step_bytes = Bt * K * 4
    target_chunk_bytes = 4 << 20                        # per-buffer target (x2 double buffer)
    Tc = int(max(1, min(max(T, 1), target_chunk_bytes // step_bytes)))
    num_chunks = max(1, pl.cdiv(max(T, 1), Tc))
    T_pad = num_chunks * Tc
    if T_pad != T:
        gi = jnp.pad(gi, ((0, T_pad - T), (0, 0), (0, 0)))

    # unroll: full for short chunks, scale down with H (vreg pressure, not throughput).
    if Tc <= 16:
        unroll = True
    elif Hl >= 512:
        unroll = 2
    else:
        unroll = 4

    vmem_limit = 2 * Tc * step_bytes + 2 * Hl * K * 4 + 2 * Bt * Hl * 4 + (4 << 20)
    vmem_limit = int(min(max(vmem_limit, 16 << 20), 48 << 20))   # v7x: 64 MiB physical per TC

    kernel = functools.partial(_gru_recurrence_kernel,
                               chunk_len=Tc, total_len=T, padded_len=T_pad, unroll=unroll)

    h_pad = pl.pallas_call(
        kernel,
        out_shape=jax.ShapeDtypeStruct((Bp, Hl), jnp.float32),
        grid=(num_btiles, num_chunks),
        in_specs=[
            pl.BlockSpec((Tc, Bt, K), lambda b, c: (c, b, 0)),   # gi chunk (pipelined)
            pl.BlockSpec((Hl, K), lambda b, c: (0, 0)),          # fused W_hh (resident)
            pl.BlockSpec((1, K), lambda b, c: (0, 0)),           # b_hh_n row (resident)
        ],
        out_specs=pl.BlockSpec((Bt, Hl), lambda b, c: (b, 0)),   # resident h accumulator
        compiler_params=pltpu.CompilerParams(
            dimension_semantics=("parallel", "arbitrary"),
            vmem_limit_bytes=vmem_limit),
    )(gi, whh_fused, bhh_fused)

    return h_pad[:B, :H][None, :, :]                    # (1, B, H), like torch GRU h_n


def init_gru_params(key, n_features, latent_dim):
    """Deterministic init matching torch.nn.GRU param shapes (uniform(-1/sqrt(H), 1/sqrt(H)))."""
    H = latent_dim
    k = 1.0 / jnp.sqrt(jnp.float32(H))
    k1, k2, k3, k4 = jax.random.split(key, 4)
    w_ih = jax.random.uniform(k1, (3 * H, n_features), jnp.float32, -k, k)
    w_hh = jax.random.uniform(k2, (3 * H, H), jnp.float32, -k, k)
    b_ih = jax.random.uniform(k3, (3 * H,), jnp.float32, -k, k)
    b_hh = jax.random.uniform(k4, (3 * H,), jnp.float32, -k, k)
    return w_ih, w_hh, b_ih, b_hh


def _reference_gru(x_btf, params):
    """Pure-JAX reference (same math as torch.nn.GRU) for correctness checking."""
    w_ih, w_hh, b_ih, b_hh = params
    B, T, F = x_btf.shape
    H = w_hh.shape[1]
    hp = jax.lax.Precision.HIGHEST

    def step(h, x_t):
        gi = jnp.dot(x_t, w_ih.T, precision=hp) + b_ih
        gh = jnp.dot(h, w_hh.T, precision=hp) + b_hh
        r = jax.nn.sigmoid(gi[:, :H] + gh[:, :H])
        z = jax.nn.sigmoid(gi[:, H:2 * H] + gh[:, H:2 * H])
        n = jnp.tanh(gi[:, 2 * H:] + r * gh[:, 2 * H:])
        h_new = (1.0 - z) * n + z * h
        return h_new, None

    h0 = jnp.zeros((B, H), jnp.float32)
    h_last, _ = jax.lax.scan(step, h0, jnp.transpose(x_btf, (1, 0, 2)))
    return h_last[None, :, :]


if __name__ == "__main__":
    # Small shapes consistent with the module: batch=2, seq=8, n_features=4, latent_dim=32
    B, T, F, H = 2, 8, 4, 32

    key = jax.random.PRNGKey(0)
    k_param, k_x = jax.random.split(key)
    params = init_gru_params(k_param, n_features=F, latent_dim=H)
    x = jax.random.normal(k_x, (B, T, F), dtype=jnp.float32)

    h_n = recurrent_encoder_forward(x, params)
    h_n = jax.block_until_ready(h_n)

    h_expected = _reference_gru(x, params)
    assert h_n.shape == (1, B, H), h_n.shape
    assert jnp.allclose(h_n, h_expected, atol=1e-5, rtol=1e-4), "mismatch vs reference"

    print("KERNEL_OK")
</pallas_src>

<mosaic_0001>
module attributes {stable_mosaic.version = 11 : i64} {
  func.func @_gru_recurrence_kernel(%arg0: i32, %arg1: i32, %arg2: memref<8x8x384xf32, #tpu.memory_space<vmem>>, %arg3: memref<128x384xf32, #tpu.memory_space<vmem>>, %arg4: memref<1x384xf32, #tpu.memory_space<vmem>>, %arg5: memref<8x128xf32, #tpu.memory_space<vmem>>) attributes {dimension_semantics = [#tpu.dimension_semantics<parallel>, #tpu.dimension_semantics<arbitrary>], iteration_bounds = array<i64: 1, 1>, scalar_prefetch = 0 : i64, scratch_operands = 0 : i64, tpu.core_type = #tpu.core_type<tc>, window_params = [{transform_indices = @transform_0, window_bounds = array<i64: 8, 8, 384>}, {pipeline_mode = #tpu.pipeline_mode<synchronous>, transform_indices = @transform_1, window_bounds = array<i64: 128, 384>}, {pipeline_mode = #tpu.pipeline_mode<synchronous>, transform_indices = @transform_2, window_bounds = array<i64: 1, 384>}, {transform_indices = @transform_3, window_bounds = array<i64: 8, 128>}]} {
    %c0_i32 = arith.constant 0 : i32
    %0 = arith.cmpi eq, %arg1, %c0_i32 : i32
    %1 = arith.extui %0 : i1 to i32
    %c0_i32_0 = arith.constant 0 : i32
    %2 = arith.cmpi ne, %1, %c0_i32_0 : i32
    scf.if %2 {
      %cst_54 = arith.constant 0.000000e+00 : f32
      %200 = vector.broadcast %cst_54 : f32 to vector<8x128xf32>
      %c0_55 = arith.constant 0 : index
      %c0_56 = arith.constant 0 : index
      %201 = vector.load %arg5[%c0_55, %c0_56] : memref<8x128xf32, #tpu.memory_space<vmem>>, vector<8x128xf32>
      tpu.vector_store %arg5[%c0_55, %c0_56], %200 {strides = array<i32>} : memref<8x128xf32, #tpu.memory_space<vmem>>, vector<8x128xf32>,
    } else {
    }
    %c0 = arith.constant 0 : index
    %c0_1 = arith.constant 0 : index
    %3 = vector.load %arg4[%c0, %c0_1] : memref<1x384xf32, #tpu.memory_space<vmem>>, vector<1x384xf32>
    %4 = vector.shape_cast %3 : vector<1x384xf32> to vector<1x384xf32>
    %5 = vector.broadcast %4 : vector<1x384xf32> to vector<8x384xf32>
    %c0_2 = arith.constant 0 : index
    %c0_3 = arith.constant 0 : index
    %6 = vector.load %arg5[%c0_2, %c0_3] : memref<8x128xf32, #tpu.memory_space<vmem>>, vector<8x128xf32>
    %c0_i32_4 = arith.constant 0 : i32
    %7 = arith.index_cast %c0_i32_4 : i32 to index
    %c0_5 = arith.constant 0 : index
    %c0_6 = arith.constant 0 : index
    %8 = vector.load %arg2[%7, %c0_5, %c0_6] : memref<8x8x384xf32, #tpu.memory_space<vmem>>, vector<1x8x384xf32>
    %9 = vector.shape_cast %8 : vector<1x8x384xf32> to vector<8x384xf32>
    %c0_7 = arith.constant 0 : index
    %c0_8 = arith.constant 0 : index
    %10 = vector.load %arg3[%c0_7, %c0_8] : memref<128x384xf32, #tpu.memory_space<vmem>>, vector<128x384xf32>
    %cst = arith.constant dense<0.000000e+00> : vector<8x384xf32>
    %11 = tpu.matmul %6, %10, %cst {dimension_numbers = #tpu.dot_dimension_numbers<[1], [0], [0], [1], [0, 0, 1, 1], [], []>} : vector<8x128xf32>, vector<128x384xf32>, vector<8x384xf32> -> vector<8x384xf32>
    %12 = arith.addf %11, %5 : vector<8x384xf32>
    %13 = vector.extract_strided_slice %9 {offsets = [0, 0], sizes = [8, 256], strides = [1, 1]} : vector<8x384xf32> to vector<8x256xf32>
    %14 = vector.extract_strided_slice %12 {offsets = [0, 0], sizes = [8, 256], strides = [1, 1]} : vector<8x384xf32> to vector<8x256xf32>
    %15 = arith.addf %13, %14 : vector<8x256xf32>
    %16 = arith.negf %15 : vector<8x256xf32>
    %17 = math.exp %16 : vector<8x256xf32>
    %cst_9 = arith.constant 1.000000e+00 : f32
    %18 = vector.broadcast %cst_9 : f32 to vector<8x256xf32>
    %19 = arith.addf %18, %17 : vector<8x256xf32>
    %20 = arith.divf %18, %19 : vector<8x256xf32>
    %21 = vector.extract_strided_slice %20 {offsets = [0, 0], sizes = [8, 128], strides = [1, 1]} : vector<8x256xf32> to vector<8x128xf32>
    %22 = vector.extract_strided_slice %20 {offsets = [0, 128], sizes = [8, 128], strides = [1, 1]} : vector<8x256xf32> to vector<8x128xf32>
    %23 = vector.extract_strided_slice %9 {offsets = [0, 256], sizes = [8, 128], strides = [1, 1]} : vector<8x384xf32> to vector<8x128xf32>
    %24 = vector.extract_strided_slice %12 {offsets = [0, 256], sizes = [8, 128], strides = [1, 1]} : vector<8x384xf32> to vector<8x128xf32>
    %25 = arith.mulf %21, %24 : vector<8x128xf32>
    %26 = arith.addf %23, %25 : vector<8x128xf32>
    %27 = math.tanh %26 : vector<8x128xf32>
    %28 = arith.subf %6, %27 : vector<8x128xf32>
    %29 = arith.mulf %22, %28 : vector<8x128xf32>
    %30 = arith.addf %27, %29 : vector<8x128xf32>
    %c1_i32 = arith.constant 1 : i32
    %31 = arith.index_cast %c1_i32 : i32 to index
    %c0_10 = arith.constant 0 : index
    %c0_11 = arith.constant 0 : index
    %32 = vector.load %arg2[%31, %c0_10, %c0_11] : memref<8x8x384xf32, #tpu.memory_space<vmem>>, vector<1x8x384xf32>
    %33 = vector.shape_cast %32 : vector<1x8x384xf32> to vector<8x384xf32>
    %c0_12 = arith.constant 0 : index
    %c0_13 = arith.constant 0 : index
    %34 = vector.load %arg3[%c0_12, %c0_13] : memref<128x384xf32, #tpu.memory_space<vmem>>, vector<128x384xf32>
    %cst_14 = arith.constant dense<0.000000e+00> : vector<8x384xf32>
    %35 = tpu.matmul %30, %34, %cst_14 {dimension_numbers = #tpu.dot_dimension_numbers<[1], [0], [0], [1], [0, 0, 1, 1], [], []>} : vector<8x128xf32>, vector<128x384xf32>, vector<8x384xf32> -> vector<8x384xf32>
    %36 = arith.addf %35, %5 : vector<8x384xf32>
    %37 = vector.extract_strided_slice %33 {offsets = [0, 0], sizes = [8, 256], strides = [1, 1]} : vector<8x384xf32> to vector<8x256xf32>
    %38 = vector.extract_strided_slice %36 {offsets = [0, 0], sizes = [8, 256], strides = [1, 1]} : vector<8x384xf32> to vector<8x256xf32>
    %39 = arith.addf %37, %38 : vector<8x256xf32>
    %40 = arith.negf %39 : vector<8x256xf32>
    %41 = math.exp %40 : vector<8x256xf32>
    %cst_15 = arith.constant 1.000000e+00 : f32
    %42 = vector.broadcast %cst_15 : f32 to vector<8x256xf32>
    %43 = arith.addf %42, %41 : vector<8x256xf32>
    %44 = arith.divf %42, %43 : vector<8x256xf32>
    %45 = vector.extract_strided_slice %44 {offsets = [0, 0], sizes = [8, 128], strides = [1, 1]} : vector<8x256xf32> to vector<8x128xf32>
    %46 = vector.extract_strided_slice %44 {offsets = [0, 128], sizes = [8, 128], strides = [1, 1]} : vector<8x256xf32> to vector<8x128xf32>
    %47 = vector.extract_strided_slice %33 {offsets = [0, 256], sizes = [8, 128], strides = [1, 1]} : vector<8x384xf32> to vector<8x128xf32>
    %48 = vector.extract_strided_slice %36 {offsets = [0, 256], sizes = [8, 128], strides = [1, 1]} : vector<8x384xf32> to vector<8x128xf32>
    %49 = arith.mulf %45, %48 : vector<8x128xf32>
    %50 = arith.addf %47, %49 : vector<8x128xf32>
    %51 = math.tanh %50 : vector<8x128xf32>
    %52 = arith.subf %30, %51 : vector<8x128xf32>
    %53 = arith.mulf %46, %52 : vector<8x128xf32>
    %54 = arith.addf %51, %53 : vector<8x128xf32>
    %c2_i32 = arith.constant 2 : i32
    %55 = arith.index_cast %c2_i32 : i32 to index
    %c0_16 = arith.constant 0 : index
    %c0_17 = arith.constant 0 : index
    %56 = vector.load %arg2[%55, %c0_16, %c0_17] : memref<8x8x384xf32, #tpu.memory_space<vmem>>, vector<1x8x384xf32>
    %57 = vector.shape_cast %56 : vector<1x8x384xf32> to vector<8x384xf32>
    %c0_18 = arith.constant 0 : index
    %c0_19 = arith.constant 0 : index
    %58 = vector.load %arg3[%c0_18, %c0_19] : memref<128x384xf32, #tpu.memory_space<vmem>>, vector<128x384xf32>
    %cst_20 = arith.constant dense<0.000000e+00> : vector<8x384xf32>
    %59 = tpu.matmul %54, %58, %cst_20 {dimension_numbers = #tpu.dot_dimension_numbers<[1], [0], [0], [1], [0, 0, 1, 1], [], []>} : vector<8x128xf32>, vector<128x384xf32>, vector<8x384xf32> -> vector<8x384xf32>
    %60 = arith.addf %59, %5 : vector<8x384xf32>
    %61 = vector.extract_strided_slice %57 {offsets = [0, 0], sizes = [8, 256], strides = [1, 1]} : vector<8x384xf32> to vector<8x256xf32>
    %62 = vector.extract_strided_slice %60 {offsets = [0, 0], sizes = [8, 256], strides = [1, 1]} : vector<8x384xf32> to vector<8x256xf32>
    %63 = arith.addf %61, %62 : vector<8x256xf32>
    %64 = arith.negf %63 : vector<8x256xf32>
    %65 = math.exp %64 : vector<8x256xf32>
    %cst_21 = arith.constant 1.000000e+00 : f32
    %66 = vector.broadcast %cst_21 : f32 to vector<8x256xf32>
    %67 = arith.addf %66, %65 : vector<8x256xf32>
    %68 = arith.divf %66, %67 : vector<8x256xf32>
    %69 = vector.extract_strided_slice %68 {offsets = [0, 0], sizes = [8, 128], strides = [1, 1]} : vector<8x256xf32> to vector<8x128xf32>
    %70 = vector.extract_strided_slice %68 {offsets = [0, 128], sizes = [8, 128], strides = [1, 1]} : vector<8x256xf32> to vector<8x128xf32>
    %71 = vector.extract_strided_slice %57 {offsets = [0, 256], sizes = [8, 128], strides = [1, 1]} : vector<8x384xf32> to vector<8x128xf32>
    %72 = vector.extract_strided_slice %60 {offsets = [0, 256], sizes = [8, 128], strides = [1, 1]} : vector<8x384xf32> to vector<8x128xf32>
    %73 = arith.mulf %69, %72 : vector<8x128xf32>
    %74 = arith.addf %71, %73 : vector<8x128xf32>
    %75 = math.tanh %74 : vector<8x128xf32>
    %76 = arith.subf %54, %75 : vector<8x128xf32>
    %77 = arith.mulf %70, %76 : vector<8x128xf32>
    %78 = arith.addf %75, %77 : vector<8x128xf32>
    %c3_i32 = arith.constant 3 : i32
    %79 = arith.index_cast %c3_i32 : i32 to index
    %c0_22 = arith.constant 0 : index
    %c0_23 = arith.constant 0 : index
    %80 = vector.load %arg2[%79, %c0_22, %c0_23] : memref<8x8x384xf32, #tpu.memory_space<vmem>>, vector<1x8x384xf32>
    %81 = vector.shape_cast %80 : vector<1x8x384xf32> to vector<8x384xf32>
    %c0_24 = arith.constant 0 : index
    %c0_25 = arith.constant 0 : index
    %82 = vector.load %arg3[%c0_24, %c0_25] : memref<128x384xf32, #tpu.memory_space<vmem>>, vector<128x384xf32>
    %cst_26 = arith.constant dense<0.000000e+00> : vector<8x384xf32>
    %83 = tpu.matmul %78, %82, %cst_26 {dimension_numbers = #tpu.dot_dimension_numbers<[1], [0], [0], [1], [0, 0, 1, 1], [], []>} : vector<8x128xf32>, vector<128x384xf32>, vector<8x384xf32> -> vector<8x384xf32>
    %84 = arith.addf %83, %5 : vector<8x384xf32>
    %85 = vector.extract_strided_slice %81 {offsets = [0, 0], sizes = [8, 256], strides = [1, 1]} : vector<8x384xf32> to vector<8x256xf32>
    %86 = vector.extract_strided_slice %84 {offsets = [0, 0], sizes = [8, 256], strides = [1, 1]} : vector<8x384xf32> to vector<8x256xf32>
    %87 = arith.addf %85, %86 : vector<8x256xf32>
    %88 = arith.negf %87 : vector<8x256xf32>
    %89 = math.exp %88 : vector<8x256xf32>
    %cst_27 = arith.constant 1.000000e+00 : f32
    %90 = vector.broadcast %cst_27 : f32 to vector<8x256xf32>
    %91 = arith.addf %90, %89 : vector<8x256xf32>
    %92 = arith.divf %90, %91 : vector<8x256xf32>
    %93 = vector.extract_strided_slice %92 {offsets = [0, 0], sizes = [8, 128], strides = [1, 1]} : vector<8x256xf32> to vector<8x128xf32>
    %94 = vector.extract_strided_slice %92 {offsets = [0, 128], sizes = [8, 128], strides = [1, 1]} : vector<8x256xf32> to vector<8x128xf32>
    %95 = vector.extract_strided_slice %81 {offsets = [0, 256], sizes = [8, 128], strides = [1, 1]} : vector<8x384xf32> to vector<8x128xf32>
    %96 = vector.extract_strided_slice %84 {offsets = [0, 256], sizes = [8, 128], strides = [1, 1]} : vector<8x384xf32> to vector<8x128xf32>
    %97 = arith.mulf %93, %96 : vector<8x128xf32>
    %98 = arith.addf %95, %97 : vector<8x128xf32>
    %99 = math.tanh %98 : vector<8x128xf32>
    %100 = arith.subf %78, %99 : vector<8x128xf32>
    %101 = arith.mulf %94, %100 : vector<8x128xf32>
    %102 = arith.addf %99, %101 : vector<8x128xf32>
    %c4_i32 = arith.constant 4 : i32
    %103 = arith.index_cast %c4_i32 : i32 to index
    %c0_28 = arith.constant 0 : index
    %c0_29 = arith.constant 0 : index
    %104 = vector.load %arg2[%103, %c0_28, %c0_29] : memref<8x8x384xf32, #tpu.memory_space<vmem>>, vector<1x8x384xf32>
    %105 = vector.shape_cast %104 : vector<1x8x384xf32> to vector<8x384xf32>
    %c0_30 = arith.constant 0 : index
    %c0_31 = arith.constant 0 : index
    %106 = vector.load %arg3[%c0_30, %c0_31] : memref<128x384xf32, #tpu.memory_space<vmem>>, vector<128x384xf32>
    %cst_32 = arith.constant dense<0.000000e+00> : vector<8x384xf32>
    %107 = tpu.matmul %102, %106, %cst_32 {dimension_numbers = #tpu.dot_dimension_numbers<[1], [0], [0], [1], [0, 0, 1, 1], [], []>} : vector<8x128xf32>, vector<128x384xf32>, vector<8x384xf32> -> vector<8x384xf32>
    %108 = arith.addf %107, %5 : vector<8x384xf32>
    %109 = vector.extract_strided_slice %105 {offsets = [0, 0], sizes = [8, 256], strides = [1, 1]} : vector<8x384xf32> to vector<8x256xf32>
    %110 = vector.extract_strided_slice %108 {offsets = [0, 0], sizes = [8, 256], strides = [1, 1]} : vector<8x384xf32> to vector<8x256xf32>
    %111 = arith.addf %109, %110 : vector<8x256xf32>
    %112 = arith.negf %111 : vector<8x256xf32>
    %113 = math.exp %112 : vector<8x256xf32>
    %cst_33 = arith.constant 1.000000e+00 : f32
    %114 = vector.broadcast %cst_33 : f32 to vector<8x256xf32>
    %115 = arith.addf %114, %113 : vector<8x256xf32>
    %116 = arith.divf %114, %115 : vector<8x256xf32>
    %117 = vector.extract_strided_slice %116 {offsets = [0, 0], sizes = [8, 128], strides = [1, 1]} : vector<8x256xf32> to vector<8x128xf32>
    %118 = vector.extract_strided_slice %116 {offsets = [0, 128], sizes = [8, 128], strides = [1, 1]} : vector<8x256xf32> to vector<8x128xf32>
    %119 = vector.extract_strided_slice %105 {offsets = [0, 256], sizes = [8, 128], strides = [1, 1]} : vector<8x384xf32> to vector<8x128xf32>
    %120 = vector.extract_strided_slice %108 {offsets = [0, 256], sizes = [8, 128], strides = [1, 1]} : vector<8x384xf32> to vector<8x128xf32>
    %121 = arith.mulf %117, %120 : vector<8x128xf32>
    %122 = arith.addf %119, %121 : vector<8x128xf32>
    %123 = math.tanh %122 : vector<8x128xf32>
    %124 = arith.subf %102, %123 : vector<8x128xf32>
    %125 = arith.mulf %118, %124 : vector<8x128xf32>
    %126 = arith.addf %123, %125 : vector<8x128xf32>
    %c5_i32 = arith.constant 5 : i32
    %127 = arith.index_cast %c5_i32 : i32 to index
    %c0_34 = arith.constant 0 : index
    %c0_35 = arith.constant 0 : index
    %128 = vector.load %arg2[%127, %c0_34, %c0_35] : memref<8x8x384xf32, #tpu.memory_space<vmem>>, vector<1x8x384xf32>
    %129 = vector.shape_cast %128 : vector<1x8x384xf32> to vector<8x384xf32>
    %c0_36 = arith.constant 0 : index
    %c0_37 = arith.constant 0 : index
    %130 = vector.load %arg3[%c0_36, %c0_37] : memref<128x384xf32, #tpu.memory_space<vmem>>, vector<128x384xf32>
    %cst_38 = arith.constant dense<0.000000e+00> : vector<8x384xf32>
    %131 = tpu.matmul %126, %130, %cst_38 {dimension_numbers = #tpu.dot_dimension_numbers<[1], [0], [0], [1], [0, 0, 1, 1], [], []>} : vector<8x128xf32>, vector<128x384xf32>, vector<8x384xf32> -> vector<8x384xf32>
    %132 = arith.addf %131, %5 : vector<8x384xf32>
    %133 = vector.extract_strided_slice %129 {offsets = [0, 0], sizes = [8, 256], strides = [1, 1]} : vector<8x384xf32> to vector<8x256xf32>
    %134 = vector.extract_strided_slice %132 {offsets = [0, 0], sizes = [8, 256], strides = [1, 1]} : vector<8x384xf32> to vector<8x256xf32>
    %135 = arith.addf %133, %134 : vector<8x256xf32>
    %136 = arith.negf %135 : vector<8x256xf32>
    %137 = math.exp %136 : vector<8x256xf32>
    %cst_39 = arith.constant 1.000000e+00 : f32
    %138 = vector.broadcast %cst_39 : f32 to vector<8x256xf32>
    %139 = arith.addf %138, %137 : vector<8x256xf32>
    %140 = arith.divf %138, %139 : vector<8x256xf32>
    %141 = vector.extract_strided_slice %140 {offsets = [0, 0], sizes = [8, 128], strides = [1, 1]} : vector<8x256xf32> to vector<8x128xf32>
    %142 = vector.extract_strided_slice %140 {offsets = [0, 128], sizes = [8, 128], strides = [1, 1]} : vector<8x256xf32> to vector<8x128xf32>
    %143 = vector.extract_strided_slice %129 {offsets = [0, 256], sizes = [8, 128], strides = [1, 1]} : vector<8x384xf32> to vector<8x128xf32>
    %144 = vector.extract_strided_slice %132 {offsets = [0, 256], sizes = [8, 128], strides = [1, 1]} : vector<8x384xf32> to vector<8x128xf32>
    %145 = arith.mulf %141, %144 : vector<8x128xf32>
    %146 = arith.addf %143, %145 : vector<8x128xf32>
    %147 = math.tanh %146 : vector<8x128xf32>
    %148 = arith.subf %126, %147 : vector<8x128xf32>
    %149 = arith.mulf %142, %148 : vector<8x128xf32>
    %150 = arith.addf %147, %149 : vector<8x128xf32>
    %c6_i32 = arith.constant 6 : i32
    %151 = arith.index_cast %c6_i32 : i32 to index
    %c0_40 = arith.constant 0 : index
    %c0_41 = arith.constant 0 : index
    %152 = vector.load %arg2[%151, %c0_40, %c0_41] : memref<8x8x384xf32, #tpu.memory_space<vmem>>, vector<1x8x384xf32>
    %153 = vector.shape_cast %152 : vector<1x8x384xf32> to vector<8x384xf32>
    %c0_42 = arith.constant 0 : index
    %c0_43 = arith.constant 0 : index
    %154 = vector.load %arg3[%c0_42, %c0_43] : memref<128x384xf32, #tpu.memory_space<vmem>>, vector<128x384xf32>
    %cst_44 = arith.constant dense<0.000000e+00> : vector<8x384xf32>
    %155 = tpu.matmul %150, %154, %cst_44 {dimension_numbers = #tpu.dot_dimension_numbers<[1], [0], [0], [1], [0, 0, 1, 1], [], []>} : vector<8x128xf32>, vector<128x384xf32>, vector<8x384xf32> -> vector<8x384xf32>
    %156 = arith.addf %155, %5 : vector<8x384xf32>
    %157 = vector.extract_strided_slice %153 {offsets = [0, 0], sizes = [8, 256], strides = [1, 1]} : vector<8x384xf32> to vector<8x256xf32>
    %158 = vector.extract_strided_slice %156 {offsets = [0, 0], sizes = [8, 256], strides = [1, 1]} : vector<8x384xf32> to vector<8x256xf32>
    %159 = arith.addf %157, %158 : vector<8x256xf32>
    %160 = arith.negf %159 : vector<8x256xf32>
    %161 = math.exp %160 : vector<8x256xf32>
    %cst_45 = arith.constant 1.000000e+00 : f32
    %162 = vector.broadcast %cst_45 : f32 to vector<8x256xf32>
    %163 = arith.addf %162, %161 : vector<8x256xf32>
    %164 = arith.divf %162, %163 : vector<8x256xf32>
    %165 = vector.extract_strided_slice %164 {offsets = [0, 0], sizes = [8, 128], strides = [1, 1]} : vector<8x256xf32> to vector<8x128xf32>
    %166 = vector.extract_strided_slice %164 {offsets = [0, 128], sizes = [8, 128], strides = [1, 1]} : vector<8x256xf32> to vector<8x128xf32>
    %167 = vector.extract_strided_slice %153 {offsets = [0, 256], sizes = [8, 128], strides = [1, 1]} : vector<8x384xf32> to vector<8x128xf32>
    %168 = vector.extract_strided_slice %156 {offsets = [0, 256], sizes = [8, 128], strides = [1, 1]} : vector<8x384xf32> to vector<8x128xf32>
    %169 = arith.mulf %165, %168 : vector<8x128xf32>
    %170 = arith.addf %167, %169 : vector<8x128xf32>
    %171 = math.tanh %170 : vector<8x128xf32>
    %172 = arith.subf %150, %171 : vector<8x128xf32>
    %173 = arith.mulf %166, %172 : vector<8x128xf32>
    %174 = arith.addf %171, %173 : vector<8x128xf32>
    %c7_i32 = arith.constant 7 : i32
    %175 = arith.index_cast %c7_i32 : i32 to index
    %c0_46 = arith.constant 0 : index
    %c0_47 = arith.constant 0 : index
    %176 = vector.load %arg2[%175, %c0_46, %c0_47] : memref<8x8x384xf32, #tpu.memory_space<vmem>>, vector<1x8x384xf32>
    %177 = vector.shape_cast %176 : vector<1x8x384xf32> to vector<8x384xf32>
    %c0_48 = arith.constant 0 : index
    %c0_49 = arith.constant 0 : index
    %178 = vector.load %arg3[%c0_48, %c0_49] : memref<128x384xf32, #tpu.memory_space<vmem>>, vector<128x384xf32>
    %cst_50 = arith.constant dense<0.000000e+00> : vector<8x384xf32>
    %179 = tpu.matmul %174, %178, %cst_50 {dimension_numbers = #tpu.dot_dimension_numbers<[1], [0], [0], [1], [0, 0, 1, 1], [], []>} : vector<8x128xf32>, vector<128x384xf32>, vector<8x384xf32> -> vector<8x384xf32>
    %180 = arith.addf %179, %5 : vector<8x384xf32>
    %181 = vector.extract_strided_slice %177 {offsets = [0, 0], sizes = [8, 256], strides = [1, 1]} : vector<8x384xf32> to vector<8x256xf32>
    %182 = vector.extract_strided_slice %180 {offsets = [0, 0], sizes = [8, 256], strides = [1, 1]} : vector<8x384xf32> to vector<8x256xf32>
    %183 = arith.addf %181, %182 : vector<8x256xf32>
    %184 = arith.negf %183 : vector<8x256xf32>
    %185 = math.exp %184 : vector<8x256xf32>
    %cst_51 = arith.constant 1.000000e+00 : f32
    %186 = vector.broadcast %cst_51 : f32 to vector<8x256xf32>
    %187 = arith.addf %186, %185 : vector<8x256xf32>
    %188 = arith.divf %186, %187 : vector<8x256xf32>
    %189 = vector.extract_strided_slice %188 {offsets = [0, 0], sizes = [8, 128], strides = [1, 1]} : vector<8x256xf32> to vector<8x128xf32>
    %190 = vector.extract_strided_slice %188 {offsets = [0, 128], sizes = [8, 128], strides = [1, 1]} : vector<8x256xf32> to vector<8x128xf32>
    %191 = vector.extract_strided_slice %177 {offsets = [0, 256], sizes = [8, 128], strides = [1, 1]} : vector<8x384xf32> to vector<8x128xf32>
    %192 = vector.extract_strided_slice %180 {offsets = [0, 256], sizes = [8, 128], strides = [1, 1]} : vector<8x384xf32> to vector<8x128xf32>
    %193 = arith.mulf %189, %192 : vector<8x128xf32>
    %194 = arith.addf %191, %193 : vector<8x128xf32>
    %195 = math.tanh %194 : vector<8x128xf32>
    %196 = arith.subf %174, %195 : vector<8x128xf32>
    %197 = arith.mulf %190, %196 : vector<8x128xf32>
    %198 = arith.addf %195, %197 : vector<8x128xf32>
    %c8_i32 = arith.constant 8 : i32
    %c0_52 = arith.constant 0 : index
    %c0_53 = arith.constant 0 : index
    %199 = vector.load %arg5[%c0_52, %c0_53] : memref<8x128xf32, #tpu.memory_space<vmem>>, vector<8x128xf32>
    tpu.vector_store %arg5[%c0_52, %c0_53], %198 {strides = array<i32>} : memref<8x128xf32, #tpu.memory_space<vmem>>, vector<8x128xf32>,
    return
  }
  func.func @transform_0(%arg0: i32, %arg1: i32) -> (i32, i32, i32) {
    %c0_i32 = arith.constant 0 : i32
    %c0_i32_0 = arith.constant 0 : i32
    return %arg1, %arg0, %c0_i32 : i32, i32, i32
  }
  func.func @transform_1(%arg0: i32, %arg1: i32) -> (i32, i32) {
    %c0_i32 = arith.constant 0 : i32
    %c0_i32_0 = arith.constant 0 : i32
    %c0_i32_1 = arith.constant 0 : i32
    return %c0_i32, %c0_i32_0 : i32, i32
  }
  func.func @transform_2(%arg0: i32, %arg1: i32) -> (i32, i32) {
    %c0_i32 = arith.constant 0 : i32
    %c0_i32_0 = arith.constant 0 : i32
    %c0_i32_1 = arith.constant 0 : i32
    return %c0_i32, %c0_i32_0 : i32, i32
  }
  func.func @transform_3(%arg0: i32, %arg1: i32) -> (i32, i32) {
    %c0_i32 = arith.constant 0 : i32
    %c0_i32_0 = arith.constant 0 : i32
    return %arg0, %c0_i32 : i32, i32
  }
}

</mosaic_0001>

<llo_original>
// kernel: recurrent_encoder_forward.1
$region0: #{recurrent_encoder_forward.1}
  #allocation0 [shape = 'u32[]', space=smem, size = 0x4, offset = 0x4, fixed_abs, tag = 'smem constant byte address 0x4 - core index']
  #allocation1 [shape = 'u32[144,128]{1,0:T(1,128)}', space=vmem, size = 0x12000, scoped, tag = 'internal scratch']
  %s0 = inlined_call_operand.vmem [shape: f32[8,8,384], index: 0, kind: input, shape index: {}]
  %s1 = inlined_call_operand.vmem [shape: f32[128,384], index: 1, kind: input, shape index: {}]
  %s2 = inlined_call_operand.vmem [shape: f32[1,384], index: 2, kind: input, shape index: {}]
  %s3 = inlined_call_operand.vmem [shape: f32[8,128], index: 3, kind: output, shape index: {}]
  %s4 = sld [smem:[#allocation0]]
  $region26: #{recurrent_encoder_forward.1} parent=0
    _
  %s6 = ssub.s32 1, %s4
  %s7 = scalar_select 0, %s6, %s4
  // Predicated region
  $region2: #{recurrent_encoder_forward.1} parent=0 // pred_check
    _
  $region3: #{recurrent_encoder_forward.1} parent=0 // pred_check_branch
    %9 = sbr.rel (0) target = $region5
  $region4: #{recurrent_encoder_forward.1} parent=0 // pred_region
    _
  $region5: #{recurrent_encoder_forward.1} parent=0 // pred_fallthru
    _
  // Predicated region
  $region6: #{recurrent_encoder_forward.1} parent=0 // pred_check
    _
  $region7: #{recurrent_encoder_forward.1} parent=0 // pred_check_branch
    %11 = sbr.rel (0) target = $region9
  $region8: #{recurrent_encoder_forward.1} parent=0 // pred_region
    _
  $region9: #{recurrent_encoder_forward.1} parent=0 // pred_fallthru
    _
  // Predicated region
  $region10: #{recurrent_encoder_forward.1} parent=0 // pred_check
    _
  $region11: #{recurrent_encoder_forward.1} parent=0 // pred_check_branch
    %13 = sbr.rel (0) target = $region13
  $region12: #{recurrent_encoder_forward.1} parent=0 // pred_region
    _
  $region13: #{recurrent_encoder_forward.1} parent=0 // pred_fallthru
    _
  %p14 = scmp.eq.s32.totalorder 0, 0
  // Predicated region
  $region14: #{recurrent_encoder_forward.1} parent=0 // pred_check
    %p15 = pneg %p14
  $region15: #{recurrent_encoder_forward.1} parent=0 // pred_check_branch
    %17 = sbr.rel (%p15) target = $region17
  $region16: #{recurrent_encoder_forward.1} parent=0 // pred_region
    %18 = vst [vmem:[%s3] sm:$0xff] 0.0
  $region17: #{recurrent_encoder_forward.1} parent=0 // pred_fallthru
    _
  %v19 = vld [vmem:[%s2] sm:$0x7]
  %v21 = vlaneseq
  %v22 = vshrl.u32 %v21, 7
  %v23 = vsub.s32 0, %v22
  %v24 = vrot.slane %v19, %v23
  %v25 = vlaneseq
  %v26 = vshrl.u32 %v25, 7
  %v27 = vsub.s32 1, %v26
  %v28 = vrot.slane %v19, %v27
  %v29 = vlaneseq
  %v30 = vshrl.u32 %v29, 7
  %v31 = vsub.s32 2, %v30
  %v32 = vrot.slane %v19, %v31
  %v36 = vld [vmem:[%s3] sm:$0xff]
  %v37 = vld [vmem:[%s0] sm:$0xff]
  %v38 = vld [vmem:[%s0 + $0x8] sm:$0xff]
  %v39 = vld [vmem:[%s0 + $0x10] sm:$0xff]
  %v40 = vld [vmem:[%s1] sm:$0xff]
  %v41 = vld [vmem:[%s1 + $0x8] sm:$0xff]
  %v42 = vld [vmem:[%s1 + $0x10] sm:$0xff]
  %v43 = vld [vmem:[%s1 + $0x18] sm:$0xff]
  %v44 = vld [vmem:[%s1 + $0x20] sm:$0xff]
  %v45 = vld [vmem:[%s1 + $0x28] sm:$0xff]
  %v46 = vld [vmem:[%s1 + $0x30] sm:$0xff]
  %v47 = vld [vmem:[%s1 + $0x38] sm:$0xff]
  %v48 = vld [vmem:[%s1 + $0x40] sm:$0xff]
  %v49 = vld [vmem:[%s1 + $0x48] sm:$0xff]
  %v50 = vld [vmem:[%s1 + $0x50] sm:$0xff]
  %v51 = vld [vmem:[%s1 + $0x58] sm:$0xff]
  %v52 = vld [vmem:[%s1 + $0x60] sm:$0xff]
  %v53 = vld [vmem:[%s1 + $0x68] sm:$0xff]
  %v54 = vld [vmem:[%s1 + $0x70] sm:$0xff]
  %v55 = vld [vmem:[%s1 + $0x78] sm:$0xff]
  %v56 = vld [vmem:[%s1 + $0x80] sm:$0xff]
  %v57 = vld [vmem:[%s1 + $0x88] sm:$0xff]
  %v58 = vld [vmem:[%s1 + $0x90] sm:$0xff]
  %v59 = vld [vmem:[%s1 + $0x98] sm:$0xff]
  %v60 = vld [vmem:[%s1 + $0xa0] sm:$0xff]
  %v61 = vld [vmem:[%s1 + $0xa8] sm:$0xff]
  %v62 = vld [vmem:[%s1 + $0xb0] sm:$0xff]
  %v63 = vld [vmem:[%s1 + $0xb8] sm:$0xff]
  %v64 = vld [vmem:[%s1 + $0xc0] sm:$0xff]
  %v65 = vld [vmem:[%s1 + $0xc8] sm:$0xff]
  %v66 = vld [vmem:[%s1 + $0xd0] sm:$0xff]
  %v67 = vld [vmem:[%s1 + $0xd8] sm:$0xff]
  %v68 = vld [vmem:[%s1 + $0xe0] sm:$0xff]
  %v69 = vld [vmem:[%s1 + $0xe8] sm:$0xff]
  %v70 = vld [vmem:[%s1 + $0xf0] sm:$0xff]
  %v71 = vld [vmem:[%s1 + $0xf8] sm:$0xff]
  %v72 = vld [vmem:[%s1 + $0x100] sm:$0xff]
  %v73 = vld [vmem:[%s1 + $0x108] sm:$0xff]
  %v74 = vld [vmem:[%s1 + $0x110] sm:$0xff]
  %v75 = vld [vmem:[%s1 + $0x118] sm:$0xff]
  %v76 = vld [vmem:[%s1 + $0x120] sm:$0xff]
  %v77 = vld [vmem:[%s1 + $0x128] sm:$0xff]
  %v78 = vld [vmem:[%s1 + $0x130] sm:$0xff]
  %v79 = vld [vmem:[%s1 + $0x138] sm:$0xff]
  %v80 = vld [vmem:[%s1 + $0x140] sm:$0xff]
  %v81 = vld [vmem:[%s1 + $0x148] sm:$0xff]
  %v82 = vld [vmem:[%s1 + $0x150] sm:$0xff]
  %v83 = vld [vmem:[%s1 + $0x158] sm:$0xff]
  %v84 = vld [vmem:[%s1 + $0x160] sm:$0xff]
  %v85 = vld [vmem:[%s1 + $0x168] sm:$0xff]
  %v86 = vld [vmem:[%s1 + $0x170] sm:$0xff]
  %v87 = vld [vmem:[%s1 + $0x178] sm:$0xff]
  %88 = vmatprep.subr.mxu0 %v86
  %89 = vmatpush1.msra.mxu0 %v85
  %90 = vmatprep.subr.mxu0 %v83
  %91 = vmatpush1.msra.mxu0 %v82
  %92 = vmatprep.subr.mxu0 %v80
  %93 = vmatpush1.msra.mxu0 %v79
  %94 = vmatprep.subr.mxu0 %v77
  %95 = vmatpush1.msra.mxu0 %v76
  %96 = vmatprep.subr.mxu0 %v74
  %97 = vmatpush1.msra.mxu0 %v73
  %98 = vmatprep.subr.mxu0 %v71
  %99 = vmatpush1.msra.mxu0 %v70
  %100 = vmatprep.subr.mxu0 %v68
  %101 = vmatpush1.msra.mxu0 %v67
  %102 = vmatprep.subr.mxu0 %v65
  %103 = vmatpush1.msra.mxu0 %v64
  %104 = vmatprep.subr.mxu0 %v62
  %105 = vmatpush1.msra.mxu0 %v61
  %106 = vmatprep.subr.mxu0 %v59
  %107 = vmatpush1.msra.mxu0 %v58
  %108 = vmatprep.subr.mxu0 %v56
  %109 = vmatpush1.msra.mxu0 %v55
  %110 = vmatprep.subr.mxu0 %v53
  %111 = vmatpush1.msra.mxu0 %v52
  %112 = vmatprep.subr.mxu0 %v50
  %113 = vmatpush1.msra.mxu0 %v49
  %114 = vmatprep.subr.mxu0 %v47
  %115 = vmatpush1.msra.mxu0 %v46
  %116 = vmatprep.subr.mxu0 %v44
  %117 = vmatpush1.msra.mxu0 %v43
  %118 = vmatprep.subr.mxu0 %v41
  %119 = vmatpush1.msra.mxu0 %v40
  %120 = vmatprep.subr.mxu0 0.0
  %121 = vmatpush2.msra.mxu0 0.0
  %122 = vmatprep.subr.mxu0 0.0
  %123 = vmatpush2.msra.mxu0 0.0
  %124 = vmatprep.subr.mxu0 0.0
  %125 = vmatpush2.msra.mxu0 0.0
  %126 = vmatprep.subr.mxu0 0.0
  %127 = vmatpush2.msra.mxu0 0.0
  %128 = vmatprep.subr.mxu0 0.0
  %129 = vmatpush2.msra.mxu0 0.0
  %130 = vmatprep.subr.mxu0 0.0
  %131 = vmatpush2.msra.mxu0 0.0
  %132 = vmatprep.subr.mxu0 0.0
  %133 = vmatpush2.msra.mxu0 0.0
  %134 = vmatprep.subr.mxu0 0.0
  %135 = vmatpush2.msra.mxu0 0.0
  %136 = vmatprep.subr.mxu0 0.0
  %137 = vmatpush2.msra.mxu0 0.0
  %138 = vmatprep.subr.mxu0 0.0
  %139 = vmatpush2.msra.mxu0 0.0
  %140 = vmatprep.subr.mxu0 0.0
  %141 = vmatpush2.msra.mxu0 0.0
  %142 = vmatprep.subr.mxu0 0.0
  %143 = vmatpush2.msra.mxu0 0.0
  %144 = vmatprep.subr.mxu0 0.0
  %145 = vmatpush2.msra.mxu0 0.0
  %146 = vmatprep.subr.mxu0 0.0
  %147 = vmatpush2.msra.mxu0 0.0
  %148 = vmatprep.subr.mxu0 0.0
  %149 = vmatpush2.msra.mxu0 0.0
  %150 = vmatprep.subr.mxu0 0.0
  %151 = vmatpush2.msra.mxu0 0.0
  %152 = vmatprep.mubr.f32.mxu0 0.0
  %153 = vmatmul.mubr.f32.gmra.mxu0 %v36
  %v154 = vpop.f32.mrf.mxu0
  %v155 = vadd.f32 %v24, %v154
  %v156 = vpop.f32.mrf.mxu0
  %v157 = vadd.f32 %v28, %v156
  %158 = vdwg.mxu0
  %159 = vmatprep.subr.mxu0 0.0
  %160 = vmatpush1.msra.mxu0 %v87
  %161 = vmatprep.subr.mxu0 0.0
  %162 = vmatpush1.msra.mxu0 %v84
  %163 = vmatprep.subr.mxu0 0.0
  %164 = vmatpush1.msra.mxu0 %v81
  %165 = vmatprep.subr.mxu0 0.0
  %166 = vmatpush1.msra.mxu0 %v78
  %167 = vmatprep.subr.mxu0 0.0
  %168 = vmatpush1.msra.mxu0 %v75
  %169 = vmatprep.subr.mxu0 0.0
  %170 = vmatpush1.msra.mxu0 %v72
  %171 = vmatprep.subr.mxu0 0.0
  %172 = vmatpush1.msra.mxu0 %v69
  %173 = vmatprep.subr.mxu0 0.0
  %174 = vmatpush1.msra.mxu0 %v66
  %175 = vmatprep.subr.mxu0 0.0
  %176 = vmatpush1.msra.mxu0 %v63
  %177 = vmatprep.subr.mxu0 0.0
  %178 = vmatpush1.msra.mxu0 %v60
  %179 = vmatprep.subr.mxu0 0.0
  %180 = vmatpush1.msra.mxu0 %v57
  %181 = vmatprep.subr.mxu0 0.0
  %182 = vmatpush1.msra.mxu0 %v54
  %183 = vmatprep.subr.mxu0 0.0
  %184 = vmatpush1.msra.mxu0 %v51
  %185 = vmatprep.subr.mxu0 0.0
  %186 = vmatpush1.msra.mxu0 %v48
  %187 = vmatprep.subr.mxu0 0.0
  %188 = vmatpush1.msra.mxu0 %v45
  %189 = vmatprep.subr.mxu0 0.0
  %190 = vmatpush1.msra.mxu0 %v42
  %191 = vmatprep.subr.mxu0 0.0
  %192 = vmatpush2.msra.mxu0 0.0
  %193 = vmatprep.subr.mxu0 0.0
  %194 = vmatpush2.msra.mxu0 0.0
  %195 = vmatprep.subr.mxu0 0.0
  %196 = vmatpush2.msra.mxu0 0.0
  %197 = vmatprep.subr.mxu0 0.0
  %198 = vmatpush2.msra.mxu0 0.0
  %199 = vmatprep.subr.mxu0 0.0
  %200 = vmatpush2.msra.mxu0 0.0
  %201 = vmatprep.subr.mxu0 0.0
  %202 = vmatpush2.msra.mxu0 0.0
  %203 = vmatprep.subr.mxu0 0.0
  %204 = vmatpush2.msra.mxu0 0.0
  %205 = vmatprep.subr.mxu0 0.0
  %206 = vmatpush2.msra.mxu0 0.0
  %207 = vmatprep.subr.mxu0 0.0
  %208 = vmatpush2.msra.mxu0 0.0
  %209 = vmatprep.subr.mxu0 0.0
  %210 = vmatpush2.msra.mxu0 0.0
  %211 = vmatprep.subr.mxu0 0.0
  %212 = vmatpush2.msra.mxu0 0.0
  %213 = vmatprep.subr.mxu0 0.0
  %214 = vmatpush2.msra.mxu0 0.0
  %215 = vmatprep.subr.mxu0 0.0
  %216 = vmatpush2.msra.mxu0 0.0
  %217 = vmatprep.subr.mxu0 0.0
  %218 = vmatpush2.msra.mxu0 0.0
  %219 = vmatprep.subr.mxu0 0.0
  %220 = vmatpush2.msra.mxu0 0.0
  %221 = vmatprep.subr.mxu0 0.0
  %222 = vmatpush2.msra.mxu0 0.0
  %223 = vmatprep.mubr.f32.mxu0 0.0
  %224 = vmatmul.mubr.f32.gmra.mxu0 %v36
  %v225 = vpop.f32.mrf.mxu0
  %v226 = vadd.f32 %v32, %v225
  %v227 = vpop.f32.mrf.mxu0
  %228 = vdwg.mxu0
  %v229 = vadd.f32 %v37, %v155
  %v230 = vadd.f32 %v38, %v157
  %v231 = vxor.u32 %v229, 2147483648
  %v232 = vxor.u32 %v230, 2147483648
  %v233 = vmul.f32 %v231, 1.442695
  %v234 = vpow.pop %v233
  %v235 = vmul.f32 %v232, 1.442695
  %v236 = vpow.pop %v235
  %v237 = vadd.f32 %v234, 1.0
  %v238 = vadd.f32 %v236, 1.0
  %v239 = vrcp.pop %v237
  %v240 = vmul.f32 1.0, %v239
  %v241 = vrcp.pop %v238
  %v242 = vmul.f32 1.0, %v241
  %v243 = vmul.f32 %v240, %v226
  %v244 = vadd.f32 %v39, %v243
  %v245 = vtanh.pop %v244
  %v246 = vsub.f32 %v36, %v245
  %v247 = vmul.f32 %v242, %v246
  %v248 = vadd.f32 %v245, %v247
  %s249 = scalar_lea.vmem %s0, 24
  %v250 = vld [vmem:[%s249] sm:$0xff]
  %v251 = vld [vmem:[%s249 + $0x8] sm:$0xff]
  %v252 = vld [vmem:[%s249 + $0x10] sm:$0xff]
  %253 = vmatprep.subr.mxu0 %v86
  %254 = vmatpush1.msra.mxu0 %v85
  %255 = vmatprep.subr.mxu0 %v83
  %256 = vmatpush1.msra.mxu0 %v82
  %257 = vmatprep.subr.mxu0 %v80
  %258 = vmatpush1.msra.mxu0 %v79
  %259 = vmatprep.subr.mxu0 %v77
  %260 = vmatpush1.msra.mxu0 %v76
  %261 = vmatprep.subr.mxu0 %v74
  %262 = vmatpush1.msra.mxu0 %v73
  %263 = vmatprep.subr.mxu0 %v71
  %264 = vmatpush1.msra.mxu0 %v70
  %265 = vmatprep.subr.mxu0 %v68
  %266 = vmatpush1.msra.mxu0 %v67
  %267 = vmatprep.subr.mxu0 %v65
  %268 = vmatpush1.msra.mxu0 %v64
  %269 = vmatprep.subr.mxu0 %v62
  %270 = vmatpush1.msra.mxu0 %v61
  %271 = vmatprep.subr.mxu0 %v59
  %272 = vmatpush1.msra.mxu0 %v58
  %273 = vmatprep.subr.mxu0 %v56
  %274 = vmatpush1.msra.mxu0 %v55
  %275 = vmatprep.subr.mxu0 %v53
  %276 = vmatpush1.msra.mxu0 %v52
  %277 = vmatprep.subr.mxu0 %v50
  %278 = vmatpush1.msra.mxu0 %v49
  %279 = vmatprep.subr.mxu0 %v47
  %280 = vmatpush1.msra.mxu0 %v46
  %281 = vmatprep.subr.mxu0 %v44
  %282 = vmatpush1.msra.mxu0 %v43
  %283 = vmatprep.subr.mxu0 %v41
  %284 = vmatpush1.msra.mxu0 %v40
  %285 = vmatprep.subr.mxu0 0.0
  %286 = vmatpush2.msra.mxu0 0.0
  %287 = vmatprep.subr.mxu0 0.0
  %288 = vmatpush2.msra.mxu0 0.0
  %289 = vmatprep.subr.mxu0 0.0
  %290 = vmatpush2.msra.mxu0 0.0
  %291 = vmatprep.subr.mxu0 0.0
  %292 = vmatpush2.msra.mxu0 0.0
  %293 = vmatprep.subr.mxu0 0.0
  %294 = vmatpush2.msra.mxu0 0.0
  %295 = vmatprep.subr.mxu0 0.0
  %296 = vmatpush2.msra.mxu0 0.0
  %297 = vmatprep.subr.mxu0 0.0
  %298 = vmatpush2.msra.mxu0 0.0
  %299 = vmatprep.subr.mxu0 0.0
  %300 = vmatpush2.msra.mxu0 0.0
  %301 = vmatprep.subr.mxu0 0.0
  %302 = vmatpush2.msra.mxu0 0.0
  %303 = vmatprep.subr.mxu0 0.0
  %304 = vmatpush2.msra.mxu0 0.0
  %305 = vmatprep.subr.mxu0 0.0
  %306 = vmatpush2.msra.mxu0 0.0
  %307 = vmatprep.subr.mxu0 0.0
  %308 = vmatpush2.msra.mxu0 0.0
  %309 = vmatprep.subr.mxu0 0.0
  %310 = vmatpush2.msra.mxu0 0.0
  %311 = vmatprep.subr.mxu0 0.0
  %312 = vmatpush2.msra.mxu0 0.0
  %313 = vmatprep.subr.mxu0 0.0
  %314 = vmatpush2.msra.mxu0 0.0
  %315 = vmatprep.subr.mxu0 0.0
  %316 = vmatpush2.msra.mxu0 0.0
  %317 = vmatprep.mubr.f32.mxu0 0.0
  %318 = vmatmul.mubr.f32.gmra.mxu0 %v248
  %v319 = vpop.f32.mrf.mxu0
  %v320 = vadd.f32 %v24, %v319
  %v321 = vpop.f32.mrf.mxu0
  %v322 = vadd.f32 %v28, %v321
  %323 = vdwg.mxu0
  %324 = vmatprep.subr.mxu0 0.0
  %325 = vmatpush1.msra.mxu0 %v87
  %326 = vmatprep.subr.mxu0 0.0
  %327 = vmatpush1.msra.mxu0 %v84
  %328 = vmatprep.subr.mxu0 0.0
  %329 = vmatpush1.msra.mxu0 %v81
  %330 = vmatprep.subr.mxu0 0.0
  %331 = vmatpush1.msra.mxu0 %v78
  %332 = vmatprep.subr.mxu0 0.0
  %333 = vmatpush1.msra.mxu0 %v75
  %334 = vmatprep.subr.mxu0 0.0
  %335 = vmatpush1.msra.mxu0 %v72
  %336 = vmatprep.subr.mxu0 0.0
  %337 = vmatpush1.msra.mxu0 %v69
  %338 = vmatprep.subr.mxu0 0.0
  %339 = vmatpush1.msra.mxu0 %v66
  %340 = vmatprep.subr.mxu0 0.0
  %341 = vmatpush1.msra.mxu0 %v63
  %342 = vmatprep.subr.mxu0 0.0
  %343 = vmatpush1.msra.mxu0 %v60
  %344 = vmatprep.subr.mxu0 0.0
  %345 = vmatpush1.msra.mxu0 %v57
  %346 = vmatprep.subr.mxu0 0.0
  %347 = vmatpush1.msra.mxu0 %v54
  %348 = vmatprep.subr.mxu0 0.0
  %349 = vmatpush1.msra.mxu0 %v51
  %350 = vmatprep.subr.mxu0 0.0
  %351 = vmatpush1.msra.mxu0 %v48
  %352 = vmatprep.subr.mxu0 0.0
  %353 = vmatpush1.msra.mxu0 %v45
  %354 = vmatprep.subr.mxu0 0.0
  %355 = vmatpush1.msra.mxu0 %v42
  %356 = vmatprep.subr.mxu0 0.0
  %357 = vmatpush2.msra.mxu0 0.0
  %358 = vmatprep.subr.mxu0 0.0
  %359 = vmatpush2.msra.mxu0 0.0
  %360 = vmatprep.subr.mxu0 0.0
  %361 = vmatpush2.msra.mxu0 0.0
  %362 = vmatprep.subr.mxu0 0.0
  %363 = vmatpush2.msra.mxu0 0.0
  %364 = vmatprep.subr.mxu0 0.0
  %365 = vmatpush2.msra.mxu0 0.0
  %366 = vmatprep.subr.mxu0 0.0
  %367 = vmatpush2.msra.mxu0 0.0
  %368 = vmatprep.subr.mxu0 0.0
  %369 = vmatpush2.msra.mxu0 0.0
  %370 = vmatprep.subr.mxu0 0.0
  %371 = vmatpush2.msra.mxu0 0.0
  %372 = vmatprep.subr.mxu0 0.0
  %373 = vmatpush2.msra.mxu0 0.0
  %374 = vmatprep.subr.mxu0 0.0
  %375 = vmatpush2.msra.mxu0 0.0
  %376 = vmatprep.subr.mxu0 0.0
  %377 = vmatpush2.msra.mxu0 0.0
  %378 = vmatprep.subr.mxu0 0.0
  %379 = vmatpush2.msra.mxu0 0.0
  %380 = vmatprep.subr.mxu0 0.0
  %381 = vmatpush2.msra.mxu0 0.0
  %382 = vmatprep.subr.mxu0 0.0
  %383 = vmatpush2.msra.mxu0 0.0
  %384 = vmatprep.subr.mxu0 0.0
  %385 = vmatpush2.msra.mxu0 0.0
  %386 = vmatprep.subr.mxu0 0.0
  %387 = vmatpush2.msra.mxu0 0.0
  %388 = vmatprep.mubr.f32.mxu0 0.0
  %389 = vmatmul.mubr.f32.gmra.mxu0 %v248
  %v390 = vpop.f32.mrf.mxu0
  %v391 = vadd.f32 %v32, %v390
  %v392 = vpop.f32.mrf.mxu0
  %393 = vdwg.mxu0
  %v394 = vadd.f32 %v250, %v320
  %v395 = vadd.f32 %v251, %v322
  %v396 = vxor.u32 %v394, 2147483648
  %v397 = vxor.u32 %v395, 2147483648
  %v398 = vmul.f32 %v396, 1.442695
  %v399 = vpow.pop %v398
  %v400 = vmul.f32 %v397, 1.442695
  %v401 = vpow.pop %v400
  %v402 = vadd.f32 %v399, 1.0
  %v403 = vadd.f32 %v401, 1.0
  %v404 = vrcp.pop %v402
  %v405 = vmul.f32 1.0, %v404
  %v406 = vrcp.pop %v403
  %v407 = vmul.f32 1.0, %v406
  %v408 = vmul.f32 %v405, %v391
  %v409 = vadd.f32 %v252, %v408
  %v410 = vtanh.pop %v409
  %v411 = vsub.f32 %v248, %v410
  %v412 = vmul.f32 %v407, %v411
  %v413 = vadd.f32 %v410, %v412
  %s414 = scalar_lea.vmem %s0, 48
  %v415 = vld [vmem:[%s414] sm:$0xff]
  %v416 = vld [vmem:[%s414 + $0x8] sm:$0xff]
  %v417 = vld [vmem:[%s414 + $0x10] sm:$0xff]
  %418 = vmatprep.subr.mxu0 %v86
  %419 = vmatpush1.msra.mxu0 %v85
  %420 = vmatprep.subr.mxu0 %v83
  %421 = vmatpush1.msra.mxu0 %v82
  %422 = vmatprep.subr.mxu0 %v80
  %423 = vmatpush1.msra.mxu0 %v79
  %424 = vmatprep.subr.mxu0 %v77
  %425 = vmatpush1.msra.mxu0 %v76
  %426 = vmatprep.subr.mxu0 %v74
  %427 = vmatpush1.msra.mxu0 %v73
  %428 = vmatprep.subr.mxu0 %v71
  %429 = vmatpush1.msra.mxu0 %v70
  %430 = vmatprep.subr.mxu0 %v68
  %431 = vmatpush1.msra.mxu0 %v67
  %432 = vmatprep.subr.mxu0 %v65
  %433 = vmatpush1.msra.mxu0 %v64
  %434 = vmatprep.subr.mxu0 %v62
  %435 = vmatpush1.msra.mxu0 %v61
  %436 = vmatprep.subr.mxu0 %v59
  %437 = vmatpush1.msra.mxu0 %v58
  %438 = vmatprep.subr.mxu0 %v56
  %439 = vmatpush1.msra.mxu0 %v55
  %440 = vmatprep.subr.mxu0 %v53
  %441 = vmatpush1.msra.mxu0 %v52
  %442 = vmatprep.subr.mxu0 %v50
  %443 = vmatpush1.msra.mxu0 %v49
  %444 = vmatprep.subr.mxu0 %v47
  %445 = vmatpush1.msra.mxu0 %v46
  %446 = vmatprep.subr.mxu0 %v44
  %447 = vmatpush1.msra.mxu0 %v43
  %448 = vmatprep.subr.mxu0 %v41
  %449 = vmatpush1.msra.mxu0 %v40
  %450 = vmatprep.subr.mxu0 0.0
  %451 = vmatpush2.msra.mxu0 0.0
  %452 = vmatprep.subr.mxu0 0.0
  %453 = vmatpush2.msra.mxu0 0.0
  %454 = vmatprep.subr.mxu0 0.0
  %455 = vmatpush2.msra.mxu0 0.0
  %456 = vmatprep.subr.mxu0 0.0
  %457 = vmatpush2.msra.mxu0 0.0
  %458 = vmatprep.subr.mxu0 0.0
  %459 = vmatpush2.msra.mxu0 0.0
  %460 = vmatprep.subr.mxu0 0.0
  %461 = vmatpush2.msra.mxu0 0.0
  %462 = vmatprep.subr.mxu0 0.0
  %463 = vmatpush2.msra.mxu0 0.0
  %464 = vmatprep.subr.mxu0 0.0
  %465 = vmatpush2.msra.mxu0 0.0
  %466 = vmatprep.subr.mxu0 0.0
  %467 = vmatpush2.msra.mxu0 0.0
  %468 = vmatprep.subr.mxu0 0.0
  %469 = vmatpush2.msra.mxu0 0.0
  %470 = vmatprep.subr.mxu0 0.0
  %471 = vmatpush2.msra.mxu0 0.0
  %472 = vmatprep.subr.mxu0 0.0
  %473 = vmatpush2.msra.mxu0 0.0
  %474 = vmatprep.subr.mxu0 0.0
  %475 = vmatpush2.msra.mxu0 0.0
  %476 = vmatprep.subr.mxu0 0.0
  %477 = vmatpush2.msra.mxu0 0.0
  %478 = vmatprep.subr.mxu0 0.0
  %479 = vmatpush2.msra.mxu0 0.0
  %480 = vmatprep.subr.mxu0 0.0
  %481 = vmatpush2.msra.mxu0 0.0
  %482 = vmatprep.mubr.f32.mxu0 0.0
  %483 = vmatmul.mubr.f32.gmra.mxu0 %v413
  %v484 = vpop.f32.mrf.mxu0
  %v485 = vadd.f32 %v24, %v484
  %v486 = vpop.f32.mrf.mxu0
  %v487 = vadd.f32 %v28, %v486
  %488 = vdwg.mxu0
  %489 = vmatprep.subr.mxu0 0.0
  %490 = vmatpush1.msra.mxu0 %v87
  %491 = vmatprep.subr.mxu0 0.0
  %492 = vmatpush1.msra.mxu0 %v84
  %493 = vmatprep.subr.mxu0 0.0
  %494 = vmatpush1.msra.mxu0 %v81
  %495 = vmatprep.subr.mxu0 0.0
  %496 = vmatpush1.msra.mxu0 %v78
  %497 = vmatprep.subr.mxu0 0.0
  %498 = vmatpush1.msra.mxu0 %v75
  %499 = vmatprep.subr.mxu0 0.0
  %500 = vmatpush1.msra.mxu0 %v72
  %501 = vmatprep.subr.mxu0 0.0
  %502 = vmatpush1.msra.mxu0 %v69
  %503 = vmatprep.subr.mxu0 0.0
  %504 = vmatpush1.msra.mxu0 %v66
  %505 = vmatprep.subr.mxu0 0.0
  %506 = vmatpush1.msra.mxu0 %v63
  %507 = vmatprep.subr.mxu0 0.0
  %508 = vmatpush1.msra.mxu0 %v60
  %509 = vmatprep.subr.mxu0 0.0
  %510 = vmatpush1.msra.mxu0 %v57
  %511 = vmatprep.subr.mxu0 0.0
  %512 = vmatpush1.msra.mxu0 %v54
  %513 = vmatprep.subr.mxu0 0.0
  %514 = vmatpush1.msra.mxu0 %v51
  %515 = vmatprep.subr.mxu0 0.0
  %516 = vmatpush1.msra.mxu0 %v48
  %517 = vmatprep.subr.mxu0 0.0
  %518 = vmatpush1.msra.mxu0 %v45
  %519 = vmatprep.subr.mxu0 0.0
  %520 = vmatpush1.msra.mxu0 %v42
  %521 = vmatprep.subr.mxu0 0.0
  %522 = vmatpush2.msra.mxu0 0.0
  %523 = vmatprep.subr.mxu0 0.0
  %524 = vmatpush2.msra.mxu0 0.0
  %525 = vmatprep.subr.mxu0 0.0
  %526 = vmatpush2.msra.mxu0 0.0
  %527 = vmatprep.subr.mxu0 0.0
  %528 = vmatpush2.msra.mxu0 0.0
  %529 = vmatprep.subr.mxu0 0.0
  %530 = vmatpush2.msra.mxu0 0.0
  %531 = vmatprep.subr.mxu0 0.0
  %532 = vmatpush2.msra.mxu0 0.0
  %533 = vmatprep.subr.mxu0 0.0
  %534 = vmatpush2.msra.mxu0 0.0
  %535 = vmatprep.subr.mxu0 0.0
  %536 = vmatpush2.msra.mxu0 0.0
  %537 = vmatprep.subr.mxu0 0.0
  %538 = vmatpush2.msra.mxu0 0.0
  %539 = vmatprep.subr.mxu0 0.0
  %540 = vmatpush2.msra.mxu0 0.0
  %541 = vmatprep.subr.mxu0 0.0
  %542 = vmatpush2.msra.mxu0 0.0
  %543 = vmatprep.subr.mxu0 0.0
  %544 = vmatpush2.msra.mxu0 0.0
  %545 = vmatprep.subr.mxu0 0.0
  %546 = vmatpush2.msra.mxu0 0.0
  %547 = vmatprep.subr.mxu0 0.0
  %548 = vmatpush2.msra.mxu0 0.0
  %549 = vmatprep.subr.mxu0 0.0
  %550 = vmatpush2.msra.mxu0 0.0
  %551 = vmatprep.subr.mxu0 0.0
  %552 = vmatpush2.msra.mxu0 0.0
  %553 = vmatprep.mubr.f32.mxu0 0.0
  %554 = vmatmul.mubr.f32.gmra.mxu0 %v413
  %v555 = vpop.f32.mrf.mxu0
  %v556 = vadd.f32 %v32, %v555
  %v557 = vpop.f32.mrf.mxu0
  %558 = vdwg.mxu0
  %v559 = vadd.f32 %v415, %v485
  %v560 = vadd.f32 %v416, %v487
  %v561 = vxor.u32 %v559, 2147483648
  %v562 = vxor.u32 %v560, 2147483648
  %v563 = vmul.f32 %v561, 1.442695
  %v564 = vpow.pop %v563
  %v565 = vmul.f32 %v562, 1.442695
  %v566 = vpow.pop %v565
  %v567 = vadd.f32 %v564, 1.0
  %v568 = vadd.f32 %v566, 1.0
  %v569 = vrcp.pop %v567
  %v570 = vmul.f32 1.0, %v569
  %v571 = vrcp.pop %v568
  %v572 = vmul.f32 1.0, %v571
  %v573 = vmul.f32 %v570, %v556
  %v574 = vadd.f32 %v417, %v573
  %v575 = vtanh.pop %v574
  %v576 = vsub.f32 %v413, %v575
  %v577 = vmul.f32 %v572, %v576
  %v578 = vadd.f32 %v575, %v577
  %s579 = scalar_lea.vmem %s0, 72
  %v580 = vld [vmem:[%s579] sm:$0xff]
  %v581 = vld [vmem:[%s579 + $0x8] sm:$0xff]
  %v582 = vld [vmem:[%s579 + $0x10] sm:$0xff]
  %583 = vmatprep.subr.mxu0 %v86
  %584 = vmatpush1.msra.mxu0 %v85
  %585 = vmatprep.subr.mxu0 %v83
  %586 = vmatpush1.msra.mxu0 %v82
  %587 = vmatprep.subr.mxu0 %v80
  %588 = vmatpush1.msra.mxu0 %v79
  %589 = vmatprep.subr.mxu0 %v77
  %590 = vmatpush1.msra.mxu0 %v76
  %591 = vmatprep.subr.mxu0 %v74
  %592 = vmatpush1.msra.mxu0 %v73
  %593 = vmatprep.subr.mxu0 %v71
  %594 = vmatpush1.msra.mxu0 %v70
  %595 = vmatprep.subr.mxu0 %v68
  %596 = vmatpush1.msra.mxu0 %v67
  %597 = vmatprep.subr.mxu0 %v65
  %598 = vmatpush1.msra.mxu0 %v64
  %599 = vmatprep.subr.mxu0 %v62
  %600 = vmatpush1.msra.mxu0 %v61
  %601 = vmatprep.subr.mxu0 %v59
  %602 = vmatpush1.msra.mxu0 %v58
  %603 = vmatprep.subr.mxu0 %v56
  %604 = vmatpush1.msra.mxu0 %v55
  %605 = vmatprep.subr.mxu0 %v53
  %606 = vmatpush1.msra.mxu0 %v52
  %607 = vmatprep.subr.mxu0 %v50
  %608 = vmatpush1.msra.mxu0 %v49
  %609 = vmatprep.subr.mxu0 %v47
  %610 = vmatpush1.msra.mxu0 %v46
  %611 = vmatprep.subr.mxu0 %v44
  %612 = vmatpush1.msra.mxu0 %v43
  %613 = vmatprep.subr.mxu0 %v41
  %614 = vmatpush1.msra.mxu0 %v40
  %615 = vmatprep.subr.mxu0 0.0
  %616 = vmatpush2.msra.mxu0 0.0
  %617 = vmatprep.subr.mxu0 0.0
  %618 = vmatpush2.msra.mxu0 0.0
  %619 = vmatprep.subr.mxu0 0.0
  %620 = vmatpush2.msra.mxu0 0.0
  %621 = vmatprep.subr.mxu0 0.0
  %622 = vmatpush2.msra.mxu0 0.0
  %623 = vmatprep.subr.mxu0 0.0
  %624 = vmatpush2.msra.mxu0 0.0
  %625 = vmatprep.subr.mxu0 0.0
  %626 = vmatpush2.msra.mxu0 0.0
  %627 = vmatprep.subr.mxu0 0.0
  %628 = vmatpush2.msra.mxu0 0.0
  %629 = vmatprep.subr.mxu0 0.0
  %630 = vmatpush2.msra.mxu0 0.0
  %631 = vmatprep.subr.mxu0 0.0
  %632 = vmatpush2.msra.mxu0 0.0
  %633 = vmatprep.subr.mxu0 0.0
  %634 = vmatpush2.msra.mxu0 0.0
  %635 = vmatprep.subr.mxu0 0.0
  %636 = vmatpush2.msra.mxu0 0.0
  %637 = vmatprep.subr.mxu0 0.0
  %638 = vmatpush2.msra.mxu0 0.0
  %639 = vmatprep.subr.mxu0 0.0
  %640 = vmatpush2.msra.mxu0 0.0
  %641 = vmatprep.subr.mxu0 0.0
  %642 = vmatpush2.msra.mxu0 0.0
  %643 = vmatprep.subr.mxu0 0.0
  %644 = vmatpush2.msra.mxu0 0.0
  %645 = vmatprep.subr.mxu0 0.0
  %646 = vmatpush2.msra.mxu0 0.0
  %647 = vmatprep.mubr.f32.mxu0 0.0
  %648 = vmatmul.mubr.f32.gmra.mxu0 %v578
  %v649 = vpop.f32.mrf.mxu0
  %v650 = vadd.f32 %v24, %v649
  %v651 = vpop.f32.mrf.mxu0
  %v652 = vadd.f32 %v28, %v651
  %653 = vdwg.mxu0
  %654 = vmatprep.subr.mxu0 0.0
  %655 = vmatpush1.msra.mxu0 %v87
  %656 = vmatprep.subr.mxu0 0.0
  %657 = vmatpush1.msra.mxu0 %v84
  %658 = vmatprep.subr.mxu0 0.0
  %659 = vmatpush1.msra.mxu0 %v81
  %660 = vmatprep.subr.mxu0 0.0
  %661 = vmatpush1.msra.mxu0 %v78
  %662 = vmatprep.subr.mxu0 0.0
  %663 = vmatpush1.msra.mxu0 %v75
  %664 = vmatprep.subr.mxu0 0.0
  %665 = vmatpush1.msra.mxu0 %v72
  %666 = vmatprep.subr.mxu0 0.0
  %667 = vmatpush1.msra.mxu0 %v69
  %668 = vmatprep.subr.mxu0 0.0
  %669 = vmatpush1.msra.mxu0 %v66
  %670 = vmatprep.subr.mxu0 0.0
  %671 = vmatpush1.msra.mxu0 %v63
  %672 = vmatprep.subr.mxu0 0.0
  %673 = vmatpush1.msra.mxu0 %v60
  %674 = vmatprep.subr.mxu0 0.0
  %675 = vmatpush1.msra.mxu0 %v57
  %676 = vmatprep.subr.mxu0 0.0
  %677 = vmatpush1.msra.mxu0 %v54
  %678 = vmatprep.subr.mxu0 0.0
  %679 = vmatpush1.msra.mxu0 %v51
  %680 = vmatprep.subr.mxu0 0.0
  %681 = vmatpush1.msra.mxu0 %v48
  %682 = vmatprep.subr.mxu0 0.0
  %683 = vmatpush1.msra.mxu0 %v45
  %684 = vmatprep.subr.mxu0 0.0
  %685 = vmatpush1.msra.mxu0 %v42
  %686 = vmatprep.subr.mxu0 0.0
  %687 = vmatpush2.msra.mxu0 0.0
  %688 = vmatprep.subr.mxu0 0.0
  %689 = vmatpush2.msra.mxu0 0.0
  %690 = vmatprep.subr.mxu0 0.0
  %691 = vmatpush2.msra.mxu0 0.0
  %692 = vmatprep.subr.mxu0 0.0
  %693 = vmatpush2.msra.mxu0 0.0
  %694 = vmatprep.subr.mxu0 0.0
  %695 = vmatpush2.msra.mxu0 0.0
  %696 = vmatprep.subr.mxu0 0.0
  %697 = vmatpush2.msra.mxu0 0.0
  %698 = vmatprep.subr.mxu0 0.0
  %699 = vmatpush2.msra.mxu0 0.0
  %700 = vmatprep.subr.mxu0 0.0
  %701 = vmatpush2.msra.mxu0 0.0
  %702 = vmatprep.subr.mxu0 0.0
  %703 = vmatpush2.msra.mxu0 0.0
  %704 = vmatprep.subr.mxu0 0.0
  %705 = vmatpush2.msra.mxu0 0.0
  %706 = vmatprep.subr.mxu0 0.0
  %707 = vmatpush2.msra.mxu0 0.0
  %708 = vmatprep.subr.mxu0 0.0
  %709 = vmatpush2.msra.mxu0 0.0
  %710 = vmatprep.subr.mxu0 0.0
  %711 = vmatpush2.msra.mxu0 0.0
  %712 = vmatprep.subr.mxu0 0.0
  %713 = vmatpush2.msra.mxu0 0.0
  %714 = vmatprep.subr.mxu0 0.0
  %715 = vmatpush2.msra.mxu0 0.0
  %716 = vmatprep.subr.mxu0 0.0
  %717 = vmatpush2.msra.mxu0 0.0
  %718 = vmatprep.mubr.f32.mxu0 0.0
  %719 = vmatmul.mubr.f32.gmra.mxu0 %v578
  %v720 = vpop.f32.mrf.mxu0
  %v721 = vadd.f32 %v32, %v720
  %v722 = vpop.f32.mrf.mxu0
  %723 = vdwg.mxu0
  %v724 = vadd.f32 %v580, %v650
  %v725 = vadd.f32 %v581, %v652
  %v726 = vxor.u32 %v724, 2147483648
  %v727 = vxor.u32 %v725, 2147483648
  %v728 = vmul.f32 %v726, 1.442695
  %v729 = vpow.pop %v728
  %v730 = vmul.f32 %v727, 1.442695
  %v731 = vpow.pop %v730
  %v732 = vadd.f32 %v729, 1.0
  %v733 = vadd.f32 %v731, 1.0
  %v734 = vrcp.pop %v732
  %v735 = vmul.f32 1.0, %v734
  %v736 = vrcp.pop %v733
  %v737 = vmul.f32 1.0, %v736
  %v738 = vmul.f32 %v735, %v721
  %v739 = vadd.f32 %v582, %v738
  %v740 = vtanh.pop %v739
  %v741 = vsub.f32 %v578, %v740
  %v742 = vmul.f32 %v737, %v741
  %v743 = vadd.f32 %v740, %v742
  %s744 = scalar_lea.vmem %s0, 96
  %v745 = vld [vmem:[%s744] sm:$0xff]
  %v746 = vld [vmem:[%s744 + $0x8] sm:$0xff]
  %v747 = vld [vmem:[%s744 + $0x10] sm:$0xff]
  %748 = vmatprep.subr.mxu0 %v86
  %749 = vmatpush1.msra.mxu0 %v85
  %750 = vmatprep.subr.mxu0 %v83
  %751 = vmatpush1.msra.mxu0 %v82
  %752 = vmatprep.subr.mxu0 %v80
  %753 = vmatpush1.msra.mxu0 %v79
  %754 = vmatprep.subr.mxu0 %v77
  %755 = vmatpush1.msra.mxu0 %v76
  %756 = vmatprep.subr.mxu0 %v74
  %757 = vmatpush1.msra.mxu0 %v73
  %758 = vmatprep.subr.mxu0 %v71
  %759 = vmatpush1.msra.mxu0 %v70
  %760 = vmatprep.subr.mxu0 %v68
  %761 = vmatpush1.msra.mxu0 %v67
  %762 = vmatprep.subr.mxu0 %v65
  %763 = vmatpush1.msra.mxu0 %v64
  %764 = vmatprep.subr.mxu0 %v62
  %765 = vmatpush1.msra.mxu0 %v61
  %766 = vmatprep.subr.mxu0 %v59
  %767 = vmatpush1.msra.mxu0 %v58
  %768 = vmatprep.subr.mxu0 %v56
  %769 = vmatpush1.msra.mxu0 %v55
  %770 = vmatprep.subr.mxu0 %v53
  %771 = vmatpush1.msra.mxu0 %v52
  %772 = vmatprep.subr.mxu0 %v50
  %773 = vmatpush1.msra.mxu0 %v49
  %774 = vmatprep.subr.mxu0 %v47
  %775 = vmatpush1.msra.mxu0 %v46
  %776 = vmatprep.subr.mxu0 %v44
  %777 = vmatpush1.msra.mxu0 %v43
  %778 = vmatprep.subr.mxu0 %v41
  %779 = vmatpush1.msra.mxu0 %v40
  %780 = vmatprep.subr.mxu0 0.0
  %781 = vmatpush2.msra.mxu0 0.0
  %782 = vmatprep.subr.mxu0 0.0
  %783 = vmatpush2.msra.mxu0 0.0
  %784 = vmatprep.subr.mxu0 0.0
  %785 = vmatpush2.msra.mxu0 0.0
  %786 = vmatprep.subr.mxu0 0.0
  %787 = vmatpush2.msra.mxu0 0.0
  %788 = vmatprep.subr.mxu0 0.0
  %789 = vmatpush2.msra.mxu0 0.0
  %790 = vmatprep.subr.mxu0 0.0
  %791 = vmatpush2.msra.mxu0 0.0
  %792 = vmatprep.subr.mxu0 0.0
  %793 = vmatpush2.msra.mxu0 0.0
  %794 = vmatprep.subr.mxu0 0.0
  %795 = vmatpush2.msra.mxu0 0.0
  %796 = vmatprep.subr.mxu0 0.0
  %797 = vmatpush2.msra.mxu0 0.0
  %798 = vmatprep.subr.mxu0 0.0
  %799 = vmatpush2.msra.mxu0 0.0
  %800 = vmatprep.subr.mxu0 0.0
  %801 = vmatpush2.msra.mxu0 0.0
  %802 = vmatprep.subr.mxu0 0.0
  %803 = vmatpush2.msra.mxu0 0.0
  %804 = vmatprep.subr.mxu0 0.0
  %805 = vmatpush2.msra.mxu0 0.0
  %806 = vmatprep.subr.mxu0 0.0
  %807 = vmatpush2.msra.mxu0 0.0
  %808 = vmatprep.subr.mxu0 0.0
  %809 = vmatpush2.msra.mxu0 0.0
  %810 = vmatprep.subr.mxu0 0.0
  %811 = vmatpush2.msra.mxu0 0.0
  %812 = vmatprep.mubr.f32.mxu0 0.0
  %813 = vmatmul.mubr.f32.gmra.mxu0 %v743
  %v814 = vpop.f32.mrf.mxu0
  %v815 = vadd.f32 %v24, %v814
  %v816 = vpop.f32.mrf.mxu0
  %v817 = vadd.f32 %v28, %v816
  %818 = vdwg.mxu0
  %819 = vmatprep.subr.mxu0 0.0
  %820 = vmatpush1.msra.mxu0 %v87
  %821 = vmatprep.subr.mxu0 0.0
  %822 = vmatpush1.msra.mxu0 %v84
  %823 = vmatprep.subr.mxu0 0.0
  %824 = vmatpush1.msra.mxu0 %v81
  %825 = vmatprep.subr.mxu0 0.0
  %826 = vmatpush1.msra.mxu0 %v78
  %827 = vmatprep.subr.mxu0 0.0
  %828 = vmatpush1.msra.mxu0 %v75
  %829 = vmatprep.subr.mxu0 0.0
  %830 = vmatpush1.msra.mxu0 %v72
  %831 = vmatprep.subr.mxu0 0.0
  %832 = vmatpush1.msra.mxu0 %v69
  %833 = vmatprep.subr.mxu0 0.0
  %834 = vmatpush1.msra.mxu0 %v66
  %835 = vmatprep.subr.mxu0 0.0
  %836 = vmatpush1.msra.mxu0 %v63
  %837 = vmatprep.subr.mxu0 0.0
  %838 = vmatpush1.msra.mxu0 %v60
  %839 = vmatprep.subr.mxu0 0.0
  %840 = vmatpush1.msra.mxu0 %v57
  %841 = vmatprep.subr.mxu0 0.0
  %842 = vmatpush1.msra.mxu0 %v54
  %843 = vmatprep.subr.mxu0 0.0
  %844 = vmatpush1.msra.mxu0 %v51
  %845 = vmatprep.subr.mxu0 0.0
  %846 = vmatpush1.msra.mxu0 %v48
  %847 = vmatprep.subr.mxu0 0.0
  %848 = vmatpush1.msra.mxu0 %v45
  %849 = vmatprep.subr.mxu0 0.0
  %850 = vmatpush1.msra.mxu0 %v42
  %851 = vmatprep.subr.mxu0 0.0
  %852 = vmatpush2.msra.mxu0 0.0
  %853 = vmatprep.subr.mxu0 0.0
  %854 = vmatpush2.msra.mxu0 0.0
  %855 = vmatprep.subr.mxu0 0.0
  %856 = vmatpush2.msra.mxu0 0.0
  %857 = vmatprep.subr.mxu0 0.0
  %858 = vmatpush2.msra.mxu0 0.0
  %859 = vmatprep.subr.mxu0 0.0
  %860 = vmatpush2.msra.mxu0 0.0
  %861 = vmatprep.subr.mxu0 0.0
  %862 = vmatpush2.msra.mxu0 0.0
  %863 = vmatprep.subr.mxu0 0.0
  %864 = vmatpush2.msra.mxu0 0.0
  %865 = vmatprep.subr.mxu0 0.0
  %866 = vmatpush2.msra.mxu0 0.0
  %867 = vmatprep.subr.mxu0 0.0
  %868 = vmatpush2.msra.mxu0 0.0
  %869 = vmatprep.subr.mxu0 0.0
  %870 = vmatpush2.msra.mxu0 0.0
  %871 = vmatprep.subr.mxu0 0.0
  %872 = vmatpush2.msra.mxu0 0.0
  %873 = vmatprep.subr.mxu0 0.0
  %874 = vmatpush2.msra.mxu0 0.0
  %875 = vmatprep.subr.mxu0 0.0
  %876 = vmatpush2.msra.mxu0 0.0
  %877 = vmatprep.subr.mxu0 0.0
  %878 = vmatpush2.msra.mxu0 0.0
  %879 = vmatprep.subr.mxu0 0.0
  %880 = vmatpush2.msra.mxu0 0.0
  %881 = vmatprep.subr.mxu0 0.0
  %882 = vmatpush2.msra.mxu0 0.0
  %883 = vmatprep.mubr.f32.mxu0 0.0
  %884 = vmatmul.mubr.f32.gmra.mxu0 %v743
  %v885 = vpop.f32.mrf.mxu0
  %v886 = vadd.f32 %v32, %v885
  %v887 = vpop.f32.mrf.mxu0
  %888 = vdwg.mxu0
  %v889 = vadd.f32 %v745, %v815
  %v890 = vadd.f32 %v746, %v817
  %v891 = vxor.u32 %v889, 2147483648
  %v892 = vxor.u32 %v890, 2147483648
  %v893 = vmul.f32 %v891, 1.442695
  %v894 = vpow.pop %v893
  %v895 = vmul.f32 %v892, 1.442695
  %v896 = vpow.pop %v895
  %v897 = vadd.f32 %v894, 1.0
  %v898 = vadd.f32 %v896, 1.0
  %v899 = vrcp.pop %v897
  %v900 = vmul.f32 1.0, %v899
  %v901 = vrcp.pop %v898
  %v902 = vmul.f32 1.0, %v901
  %v903 = vmul.f32 %v900, %v886
  %v904 = vadd.f32 %v747, %v903
  %v905 = vtanh.pop %v904
  %v906 = vsub.f32 %v743, %v905
  %v907 = vmul.f32 %v902, %v906
  %v908 = vadd.f32 %v905, %v907
  %s909 = scalar_lea.vmem %s0, 120
  %v910 = vld [vmem:[%s909] sm:$0xff]
  %v911 = vld [vmem:[%s909 + $0x8] sm:$0xff]
  %v912 = vld [vmem:[%s909 + $0x10] sm:$0xff]
  %913 = vmatprep.subr.mxu0 %v86
  %914 = vmatpush1.msra.mxu0 %v85
  %915 = vmatprep.subr.mxu0 %v83
  %916 = vmatpush1.msra.mxu0 %v82
  %917 = vmatprep.subr.mxu0 %v80
  %918 = vmatpush1.msra.mxu0 %v79
  %919 = vmatprep.subr.mxu0 %v77
  %920 = vmatpush1.msra.mxu0 %v76
  %921 = vmatprep.subr.mxu0 %v74
  %922 = vmatpush1.msra.mxu0 %v73
  %923 = vmatprep.subr.mxu0 %v71
  %924 = vmatpush1.msra.mxu0 %v70
  %925 = vmatprep.subr.mxu0 %v68
  %926 = vmatpush1.msra.mxu0 %v67
  %927 = vmatprep.subr.mxu0 %v65
  %928 = vmatpush1.msra.mxu0 %v64
  %929 = vmatprep.subr.mxu0 %v62
  %930 = vmatpush1.msra.mxu0 %v61
  %931 = vmatprep.subr.mxu0 %v59
  %932 = vmatpush1.msra.mxu0 %v58
  %933 = vmatprep.subr.mxu0 %v56
  %934 = vmatpush1.msra.mxu0 %v55
  %935 = vmatprep.subr.mxu0 %v53
  %936 = vmatpush1.msra.mxu0 %v52
  %937 = vmatprep.subr.mxu0 %v50
  %938 = vmatpush1.msra.mxu0 %v49
  %939 = vmatprep.subr.mxu0 %v47
  %940 = vmatpush1.msra.mxu0 %v46
  %941 = vmatprep.subr.mxu0 %v44
  %942 = vmatpush1.msra.mxu0 %v43
  %943 = vmatprep.subr.mxu0 %v41
  %944 = vmatpush1.msra.mxu0 %v40
  %945 = vmatprep.subr.mxu0 0.0
  %946 = vmatpush2.msra.mxu0 0.0
  %947 = vmatprep.subr.mxu0 0.0
  %948 = vmatpush2.msra.mxu0 0.0
  %949 = vmatprep.subr.mxu0 0.0
  %950 = vmatpush2.msra.mxu0 0.0
  %951 = vmatprep.subr.mxu0 0.0
  %952 = vmatpush2.msra.mxu0 0.0
  %953 = vmatprep.subr.mxu0 0.0
  %954 = vmatpush2.msra.mxu0 0.0
  %955 = vmatprep.subr.mxu0 0.0
  %956 = vmatpush2.msra.mxu0 0.0
  %957 = vmatprep.subr.mxu0 0.0
  %958 = vmatpush2.msra.mxu0 0.0
  %959 = vmatprep.subr.mxu0 0.0
  %960 = vmatpush2.msra.mxu0 0.0
  %961 = vmatprep.subr.mxu0 0.0
  %962 = vmatpush2.msra.mxu0 0.0
  %963 = vmatprep.subr.mxu0 0.0
  %964 = vmatpush2.msra.mxu0 0.0
  %965 = vmatprep.subr.mxu0 0.0
  %966 = vmatpush2.msra.mxu0 0.0
  %967 = vmatprep.subr.mxu0 0.0
  %968 = vmatpush2.msra.mxu0 0.0
  %969 = vmatprep.subr.mxu0 0.0
  %970 = vmatpush2.msra.mxu0 0.0
  %971 = vmatprep.subr.mxu0 0.0
  %972 = vmatpush2.msra.mxu0 0.0
  %973 = vmatprep.subr.mxu0 0.0
  %974 = vmatpush2.msra.mxu0 0.0
  %975 = vmatprep.subr.mxu0 0.0
  %976 = vmatpush2.msra.mxu0 0.0
  %977 = vmatprep.mubr.f32.mxu0 0.0
  %978 = vmatmul.mubr.f32.gmra.mxu0 %v908
  %v979 = vpop.f32.mrf.mxu0
  %v980 = vadd.f32 %v24, %v979
  %v981 = vpop.f32.mrf.mxu0
  %v982 = vadd.f32 %v28, %v981
  %983 = vdwg.mxu0
  %984 = vmatprep.subr.mxu0 0.0
  %985 = vmatpush1.msra.mxu0 %v87
  %986 = vmatprep.subr.mxu0 0.0
  %987 = vmatpush1.msra.mxu0 %v84
  %988 = vmatprep.subr.mxu0 0.0
  %989 = vmatpush1.msra.mxu0 %v81
  %990 = vmatprep.subr.mxu0 0.0
  %991 = vmatpush1.msra.mxu0 %v78
  %992 = vmatprep.subr.mxu0 0.0
  %993 = vmatpush1.msra.mxu0 %v75
  %994 = vmatprep.subr.mxu0 0.0
  %995 = vmatpush1.msra.mxu0 %v72
  %996 = vmatprep.subr.mxu0 0.0
  %997 = vmatpush1.msra.mxu0 %v69
  %998 = vmatprep.subr.mxu0 0.0
  %999 = vmatpush1.msra.mxu0 %v66
  %1000 = vmatprep.subr.mxu0 0.0
  %1001 = vmatpush1.msra.mxu0 %v63
  %1002 = vmatprep.subr.mxu0 0.0
  %1003 = vmatpush1.msra.mxu0 %v60
  %1004 = vmatprep.subr.mxu0 0.0
  %1005 = vmatpush1.msra.mxu0 %v57
  %1006 = vmatprep.subr.mxu0 0.0
  %1007 = vmatpush1.msra.mxu0 %v54
  %1008 = vmatprep.subr.mxu0 0.0
  %1009 = vmatpush1.msra.mxu0 %v51
  %1010 = vmatprep.subr.mxu0 0.0
  %1011 = vmatpush1.msra.mxu0 %v48
  %1012 = vmatprep.subr.mxu0 0.0
  %1013 = vmatpush1.msra.mxu0 %v45
  %1014 = vmatprep.subr.mxu0 0.0
  %1015 = vmatpush1.msra.mxu0 %v42
  %1016 = vmatprep.subr.mxu0 0.0
  %1017 = vmatpush2.msra.mxu0 0.0
  %1018 = vmatprep.subr.mxu0 0.0
  %1019 = vmatpush2.msra.mxu0 0.0
  %1020 = vmatprep.subr.mxu0 0.0
  %1021 = vmatpush2.msra.mxu0 0.0
  %1022 = vmatprep.subr.mxu0 0.0
  %1023 = vmatpush2.msra.mxu0 0.0
  %1024 = vmatprep.subr.mxu0 0.0
  %1025 = vmatpush2.msra.mxu0 0.0
  %1026 = vmatprep.subr.mxu0 0.0
  %1027 = vmatpush2.msra.mxu0 0.0
  %1028 = vmatprep.subr.mxu0 0.0
  %1029 = vmatpush2.msra.mxu0 0.0
  %1030 = vmatprep.subr.mxu0 0.0
  %1031 = vmatpush2.msra.mxu0 0.0
  %1032 = vmatprep.subr.mxu0 0.0
  %1033 = vmatpush2.msra.mxu0 0.0
  %1034 = vmatprep.subr.mxu0 0.0
  %1035 = vmatpush2.msra.mxu0 0.0
  %1036 = vmatprep.subr.mxu0 0.0
  %1037 = vmatpush2.msra.mxu0 0.0
  %1038 = vmatprep.subr.mxu0 0.0
  %1039 = vmatpush2.msra.mxu0 0.0
  %1040 = vmatprep.subr.mxu0 0.0
  %1041 = vmatpush2.msra.mxu0 0.0
  %1042 = vmatprep.subr.mxu0 0.0
  %1043 = vmatpush2.msra.mxu0 0.0
  %1044 = vmatprep.subr.mxu0 0.0
  %1045 = vmatpush2.msra.mxu0 0.0
  %1046 = vmatprep.subr.mxu0 0.0
  %1047 = vmatpush2.msra.mxu0 0.0
  %1048 = vmatprep.mubr.f32.mxu0 0.0
  %1049 = vmatmul.mubr.f32.gmra.mxu0 %v908
  %v1050 = vpop.f32.mrf.mxu0
  %v1051 = vadd.f32 %v32, %v1050
  %v1052 = vpop.f32.mrf.mxu0
  %1053 = vdwg.mxu0
  %v1054 = vadd.f32 %v910, %v980
  %v1055 = vadd.f32 %v911, %v982
  %v1056 = vxor.u32 %v1054, 2147483648
  %v1057 = vxor.u32 %v1055, 2147483648
  %v1058 = vmul.f32 %v1056, 1.442695
  %v1059 = vpow.pop %v1058
  %v1060 = vmul.f32 %v1057, 1.442695
  %v1061 = vpow.pop %v1060
  %v1062 = vadd.f32 %v1059, 1.0
  %v1063 = vadd.f32 %v1061, 1.0
  %v1064 = vrcp.pop %v1062
  %v1065 = vmul.f32 1.0, %v1064
  %v1066 = vrcp.pop %v1063
  %v1067 = vmul.f32 1.0, %v1066
  %v1068 = vmul.f32 %v1065, %v1051
  %v1069 = vadd.f32 %v912, %v1068
  %v1070 = vtanh.pop %v1069
  %v1071 = vsub.f32 %v908, %v1070
  %v1072 = vmul.f32 %v1067, %v1071
  %v1073 = vadd.f32 %v1070, %v1072
  %s1074 = scalar_lea.vmem %s0, 144
  %v1075 = vld [vmem:[%s1074] sm:$0xff]
  %v1076 = vld [vmem:[%s1074 + $0x8] sm:$0xff]
  %v1077 = vld [vmem:[%s1074 + $0x10] sm:$0xff]
  %1078 = vmatprep.subr.mxu0 %v86
  %1079 = vmatpush1.msra.mxu0 %v85
  %1080 = vmatprep.subr.mxu0 %v83
  %1081 = vmatpush1.msra.mxu0 %v82
  %1082 = vmatprep.subr.mxu0 %v80
  %1083 = vmatpush1.msra.mxu0 %v79
  %1084 = vmatprep.subr.mxu0 %v77
  %1085 = vmatpush1.msra.mxu0 %v76
  %1086 = vmatprep.subr.mxu0 %v74
  %1087 = vmatpush1.msra.mxu0 %v73
  %1088 = vmatprep.subr.mxu0 %v71
  %1089 = vmatpush1.msra.mxu0 %v70
  %1090 = vmatprep.subr.mxu0 %v68
  %1091 = vmatpush1.msra.mxu0 %v67
  %1092 = vmatprep.subr.mxu0 %v65
  %1093 = vmatpush1.msra.mxu0 %v64
  %1094 = vmatprep.subr.mxu0 %v62
  %1095 = vmatpush1.msra.mxu0 %v61
  %1096 = vmatprep.subr.mxu0 %v59
  %1097 = vmatpush1.msra.mxu0 %v58
  %1098 = vmatprep.subr.mxu0 %v56
  %1099 = vmatpush1.msra.mxu0 %v55
  %1100 = vmatprep.subr.mxu0 %v53
  %1101 = vmatpush1.msra.mxu0 %v52
  %1102 = vmatprep.subr.mxu0 %v50
  %1103 = vmatpush1.msra.mxu0 %v49
  %1104 = vmatprep.subr.mxu0 %v47
  %1105 = vmatpush1.msra.mxu0 %v46
  %1106 = vmatprep.subr.mxu0 %v44
  %1107 = vmatpush1.msra.mxu0 %v43
  %1108 = vmatprep.subr.mxu0 %v41
  %1109 = vmatpush1.msra.mxu0 %v40
  %1110 = vmatprep.subr.mxu0 0.0
  %1111 = vmatpush2.msra.mxu0 0.0
  %1112 = vmatprep.subr.mxu0 0.0
  %1113 = vmatpush2.msra.mxu0 0.0
  %1114 = vmatprep.subr.mxu0 0.0
  %1115 = vmatpush2.msra.mxu0 0.0
  %1116 = vmatprep.subr.mxu0 0.0
  %1117 = vmatpush2.msra.mxu0 0.0
  %1118 = vmatprep.subr.mxu0 0.0
  %1119 = vmatpush2.msra.mxu0 0.0
  %1120 = vmatprep.subr.mxu0 0.0
  %1121 = vmatpush2.msra.mxu0 0.0
  %1122 = vmatprep.subr.mxu0 0.0
  %1123 = vmatpush2.msra.mxu0 0.0
  %1124 = vmatprep.subr.mxu0 0.0
  %1125 = vmatpush2.msra.mxu0 0.0
  %1126 = vmatprep.subr.mxu0 0.0
  %1127 = vmatpush2.msra.mxu0 0.0
  %1128 = vmatprep.subr.mxu0 0.0
  %1129 = vmatpush2.msra.mxu0 0.0
  %1130 = vmatprep.subr.mxu0 0.0
  %1131 = vmatpush2.msra.mxu0 0.0
  %1132 = vmatprep.subr.mxu0 0.0
  %1133 = vmatpush2.msra.mxu0 0.0
  %1134 = vmatprep.subr.mxu0 0.0
  %1135 = vmatpush2.msra.mxu0 0.0
  %1136 = vmatprep.subr.mxu0 0.0
  %1137 = vmatpush2.msra.mxu0 0.0
  %1138 = vmatprep.subr.mxu0 0.0
  %1139 = vmatpush2.msra.mxu0 0.0
  %1140 = vmatprep.subr.mxu0 0.0
  %1141 = vmatpush2.msra.mxu0 0.0
  %1142 = vmatprep.mubr.f32.mxu0 0.0
  %1143 = vmatmul.mubr.f32.gmra.mxu0 %v1073
  %v1144 = vpop.f32.mrf.mxu0
  %v1145 = vadd.f32 %v24, %v1144
  %v1146 = vpop.f32.mrf.mxu0
  %v1147 = vadd.f32 %v28, %v1146
  %1148 = vdwg.mxu0
  %1149 = vmatprep.subr.mxu0 0.0
  %1150 = vmatpush1.msra.mxu0 %v87
  %1151 = vmatprep.subr.mxu0 0.0
  %1152 = vmatpush1.msra.mxu0 %v84
  %1153 = vmatprep.subr.mxu0 0.0
  %1154 = vmatpush1.msra.mxu0 %v81
  %1155 = vmatprep.subr.mxu0 0.0
  %1156 = vmatpush1.msra.mxu0 %v78
  %1157 = vmatprep.subr.mxu0 0.0
  %1158 = vmatpush1.msra.mxu0 %v75
  %1159 = vmatprep.subr.mxu0 0.0
  %1160 = vmatpush1.msra.mxu0 %v72
  %1161 = vmatprep.subr.mxu0 0.0
  %1162 = vmatpush1.msra.mxu0 %v69
  %1163 = vmatprep.subr.mxu0 0.0
  %1164 = vmatpush1.msra.mxu0 %v66
  %1165 = vmatprep.subr.mxu0 0.0
  %1166 = vmatpush1.msra.mxu0 %v63
  %1167 = vmatprep.subr.mxu0 0.0
  %1168 = vmatpush1.msra.mxu0 %v60
  %1169 = vmatprep.subr.mxu0 0.0
  %1170 = vmatpush1.msra.mxu0 %v57
  %1171 = vmatprep.subr.mxu0 0.0
  %1172 = vmatpush1.msra.mxu0 %v54
  %1173 = vmatprep.subr.mxu0 0.0
  %1174 = vmatpush1.msra.mxu0 %v51
  %1175 = vmatprep.subr.mxu0 0.0
  %1176 = vmatpush1.msra.mxu0 %v48
  %1177 = vmatprep.subr.mxu0 0.0
  %1178 = vmatpush1.msra.mxu0 %v45
  %1179 = vmatprep.subr.mxu0 0.0
  %1180 = vmatpush1.msra.mxu0 %v42
  %1181 = vmatprep.subr.mxu0 0.0
  %1182 = vmatpush2.msra.mxu0 0.0
  %1183 = vmatprep.subr.mxu0 0.0
  %1184 = vmatpush2.msra.mxu0 0.0
  %1185 = vmatprep.subr.mxu0 0.0
  %1186 = vmatpush2.msra.mxu0 0.0
  %1187 = vmatprep.subr.mxu0 0.0
  %1188 = vmatpush2.msra.mxu0 0.0
  %1189 = vmatprep.subr.mxu0 0.0
  %1190 = vmatpush2.msra.mxu0 0.0
  %1191 = vmatprep.subr.mxu0 0.0
  %1192 = vmatpush2.msra.mxu0 0.0
  %1193 = vmatprep.subr.mxu0 0.0
  %1194 = vmatpush2.msra.mxu0 0.0
  %1195 = vmatprep.subr.mxu0 0.0
  %1196 = vmatpush2.msra.mxu0 0.0
  %1197 = vmatprep.subr.mxu0 0.0
  %1198 = vmatpush2.msra.mxu0 0.0
  %1199 = vmatprep.subr.mxu0 0.0
  %1200 = vmatpush2.msra.mxu0 0.0
  %1201 = vmatprep.subr.mxu0 0.0
  %1202 = vmatpush2.msra.mxu0 0.0
  %1203 = vmatprep.subr.mxu0 0.0
  %1204 = vmatpush2.msra.mxu0 0.0
  %1205 = vmatprep.subr.mxu0 0.0
  %1206 = vmatpush2.msra.mxu0 0.0
  %1207 = vmatprep.subr.mxu0 0.0
  %1208 = vmatpush2.msra.mxu0 0.0
  %1209 = vmatprep.subr.mxu0 0.0
  %1210 = vmatpush2.msra.mxu0 0.0
  %1211 = vmatprep.subr.mxu0 0.0
  %1212 = vmatpush2.msra.mxu0 0.0
  %1213 = vmatprep.mubr.f32.mxu0 0.0
  %1214 = vmatmul.mubr.f32.gmra.mxu0 %v1073
  %v1215 = vpop.f32.mrf.mxu0
  %v1216 = vadd.f32 %v32, %v1215
  %v1217 = vpop.f32.mrf.mxu0
  %1218 = vdwg.mxu0
  %v1219 = vadd.f32 %v1075, %v1145
  %v1220 = vadd.f32 %v1076, %v1147
  %v1221 = vxor.u32 %v1219, 2147483648
  %v1222 = vxor.u32 %v1220, 2147483648
  %v1223 = vmul.f32 %v1221, 1.442695
  %v1224 = vpow.pop %v1223
  %v1225 = vmul.f32 %v1222, 1.442695
  %v1226 = vpow.pop %v1225
  %v1227 = vadd.f32 %v1224, 1.0
  %v1228 = vadd.f32 %v1226, 1.0
  %v1229 = vrcp.pop %v1227
  %v1230 = vmul.f32 1.0, %v1229
  %v1231 = vrcp.pop %v1228
  %v1232 = vmul.f32 1.0, %v1231
  %v1233 = vmul.f32 %v1230, %v1216
  %v1234 = vadd.f32 %v1077, %v1233
  %v1235 = vtanh.pop %v1234
  %v1236 = vsub.f32 %v1073, %v1235
  %v1237 = vmul.f32 %v1232, %v1236
  %v1238 = vadd.f32 %v1235, %v1237
  %s1239 = scalar_lea.vmem %s0, 168
  %v1240 = vld [vmem:[%s1239] sm:$0xff]
  %v1241 = vld [vmem:[%s1239 + $0x8] sm:$0xff]
  %v1242 = vld [vmem:[%s1239 + $0x10] sm:$0xff]
  %1243 = vmatprep.subr.mxu0 %v86
  %1244 = vmatpush1.msra.mxu0 %v85
  %1245 = vmatprep.subr.mxu0 %v83
  %1246 = vmatpush1.msra.mxu0 %v82
  %1247 = vmatprep.subr.mxu0 %v80
  %1248 = vmatpush1.msra.mxu0 %v79
  %1249 = vmatprep.subr.mxu0 %v77
  %1250 = vmatpush1.msra.mxu0 %v76
  %1251 = vmatprep.subr.mxu0 %v74
  %1252 = vmatpush1.msra.mxu0 %v73
  %1253 = vmatprep.subr.mxu0 %v71
  %1254 = vmatpush1.msra.mxu0 %v70
  %1255 = vmatprep.subr.mxu0 %v68
  %1256 = vmatpush1.msra.mxu0 %v67
  %1257 = vmatprep.subr.mxu0 %v65
  %1258 = vmatpush1.msra.mxu0 %v64
  %1259 = vmatprep.subr.mxu0 %v62
  %1260 = vmatpush1.msra.mxu0 %v61
  %1261 = vmatprep.subr.mxu0 %v59
  %1262 = vmatpush1.msra.mxu0 %v58
  %1263 = vmatprep.subr.mxu0 %v56
  %1264 = vmatpush1.msra.mxu0 %v55
  %1265 = vmatprep.subr.mxu0 %v53
  %1266 = vmatpush1.msra.mxu0 %v52
  %1267 = vmatprep.subr.mxu0 %v50
  %1268 = vmatpush1.msra.mxu0 %v49
  %1269 = vmatprep.subr.mxu0 %v47
  %1270 = vmatpush1.msra.mxu0 %v46
  %1271 = vmatprep.subr.mxu0 %v44
  %1272 = vmatpush1.msra.mxu0 %v43
  %1273 = vmatprep.subr.mxu0 %v41
  %1274 = vmatpush1.msra.mxu0 %v40
  %1275 = vmatprep.subr.mxu0 0.0
  %1276 = vmatpush2.msra.mxu0 0.0
  %1277 = vmatprep.subr.mxu0 0.0
  %1278 = vmatpush2.msra.mxu0 0.0
  %1279 = vmatprep.subr.mxu0 0.0
  %1280 = vmatpush2.msra.mxu0 0.0
  %1281 = vmatprep.subr.mxu0 0.0
  %1282 = vmatpush2.msra.mxu0 0.0
  %1283 = vmatprep.subr.mxu0 0.0
  %1284 = vmatpush2.msra.mxu0 0.0
  %1285 = vmatprep.subr.mxu0 0.0
  %1286 = vmatpush2.msra.mxu0 0.0
  %1287 = vmatprep.subr.mxu0 0.0
  %1288 = vmatpush2.msra.mxu0 0.0
  %1289 = vmatprep.subr.mxu0 0.0
  %1290 = vmatpush2.msra.mxu0 0.0
  %1291 = vmatprep.subr.mxu0 0.0
  %1292 = vmatpush2.msra.mxu0 0.0
  %1293 = vmatprep.subr.mxu0 0.0
  %1294 = vmatpush2.msra.mxu0 0.0
  %1295 = vmatprep.subr.mxu0 0.0
  %1296 = vmatpush2.msra.mxu0 0.0
  %1297 = vmatprep.subr.mxu0 0.0
  %1298 = vmatpush2.msra.mxu0 0.0
  %1299 = vmatprep.subr.mxu0 0.0
  %1300 = vmatpush2.msra.mxu0 0.0
  %1301 = vmatprep.subr.mxu0 0.0
  %1302 = vmatpush2.msra.mxu0 0.0
  %1303 = vmatprep.subr.mxu0 0.0
  %1304 = vmatpush2.msra.mxu0 0.0
  %1305 = vmatprep.subr.mxu0 0.0
  %1306 = vmatpush2.msra.mxu0 0.0
  %1307 = vmatprep.mubr.f32.mxu0 0.0
  %1308 = vmatmul.mubr.f32.gmra.mxu0 %v1238
  %v1309 = vpop.f32.mrf.mxu0
  %v1310 = vadd.f32 %v24, %v1309
  %v1311 = vpop.f32.mrf.mxu0
  %v1312 = vadd.f32 %v28, %v1311
  %1313 = vdwg.mxu0
  %1314 = vmatprep.subr.mxu0 0.0
  %1315 = vmatpush1.msra.mxu0 %v87
  %1316 = vmatprep.subr.mxu0 0.0
  %1317 = vmatpush1.msra.mxu0 %v84
  %1318 = vmatprep.subr.mxu0 0.0
  %1319 = vmatpush1.msra.mxu0 %v81
  %1320 = vmatprep.subr.mxu0 0.0
  %1321 = vmatpush1.msra.mxu0 %v78
  %1322 = vmatprep.subr.mxu0 0.0
  %1323 = vmatpush1.msra.mxu0 %v75
  %1324 = vmatprep.subr.mxu0 0.0
  %1325 = vmatpush1.msra.mxu0 %v72
  %1326 = vmatprep.subr.mxu0 0.0
  %1327 = vmatpush1.msra.mxu0 %v69
  %1328 = vmatprep.subr.mxu0 0.0
  %1329 = vmatpush1.msra.mxu0 %v66
  %1330 = vmatprep.subr.mxu0 0.0
  %1331 = vmatpush1.msra.mxu0 %v63
  %1332 = vmatprep.subr.mxu0 0.0
  %1333 = vmatpush1.msra.mxu0 %v60
  %1334 = vmatprep.subr.mxu0 0.0
  %1335 = vmatpush1.msra.mxu0 %v57
  %1336 = vmatprep.subr.mxu0 0.0
  %1337 = vmatpush1.msra.mxu0 %v54
  %1338 = vmatprep.subr.mxu0 0.0
  %1339 = vmatpush1.msra.mxu0 %v51
  %1340 = vmatprep.subr.mxu0 0.0
  %1341 = vmatpush1.msra.mxu0 %v48
  %1342 = vmatprep.subr.mxu0 0.0
  %1343 = vmatpush1.msra.mxu0 %v45
  %1344 = vmatprep.subr.mxu0 0.0
  %1345 = vmatpush1.msra.mxu0 %v42
  %1346 = vmatprep.subr.mxu0 0.0
  %1347 = vmatpush2.msra.mxu0 0.0
  %1348 = vmatprep.subr.mxu0 0.0
  %1349 = vmatpush2.msra.mxu0 0.0
  %1350 = vmatprep.subr.mxu0 0.0
  %1351 = vmatpush2.msra.mxu0 0.0
  %1352 = vmatprep.subr.mxu0 0.0
  %1353 = vmatpush2.msra.mxu0 0.0
  %1354 = vmatprep.subr.mxu0 0.0
  %1355 = vmatpush2.msra.mxu0 0.0
  %1356 = vmatprep.subr.mxu0 0.0
  %1357 = vmatpush2.msra.mxu0 0.0
  %1358 = vmatprep.subr.mxu0 0.0
  %1359 = vmatpush2.msra.mxu0 0.0
  %1360 = vmatprep.subr.mxu0 0.0
  %1361 = vmatpush2.msra.mxu0 0.0
  %1362 = vmatprep.subr.mxu0 0.0
  %1363 = vmatpush2.msra.mxu0 0.0
  %1364 = vmatprep.subr.mxu0 0.0
  %1365 = vmatpush2.msra.mxu0 0.0
  %1366 = vmatprep.subr.mxu0 0.0
  %1367 = vmatpush2.msra.mxu0 0.0
  %1368 = vmatprep.subr.mxu0 0.0
  %1369 = vmatpush2.msra.mxu0 0.0
  %1370 = vmatprep.subr.mxu0 0.0
  %1371 = vmatpush2.msra.mxu0 0.0
  %1372 = vmatprep.subr.mxu0 0.0
  %1373 = vmatpush2.msra.mxu0 0.0
  %1374 = vmatprep.subr.mxu0 0.0
  %1375 = vmatpush2.msra.mxu0 0.0
  %1376 = vmatprep.subr.mxu0 0.0
  %1377 = vmatpush2.msra.mxu0 0.0
  %1378 = vmatprep.mubr.f32.mxu0 0.0
  %1379 = vmatmul.mubr.f32.gmra.mxu0 %v1238
  %v1380 = vpop.f32.mrf.mxu0
  %v1381 = vadd.f32 %v32, %v1380
  %v1382 = vpop.f32.mrf.mxu0
  %1383 = vdwg.mxu0
  %v1384 = vadd.f32 %v1240, %v1310
  %v1385 = vadd.f32 %v1241, %v1312
  %v1386 = vxor.u32 %v1384, 2147483648
  %v1387 = vxor.u32 %v1385, 2147483648
  %v1388 = vmul.f32 %v1386, 1.442695
  %v1389 = vpow.pop %v1388
  %v1390 = vmul.f32 %v1387, 1.442695
  %v1391 = vpow.pop %v1390
  %v1392 = vadd.f32 %v1389, 1.0
  %v1393 = vadd.f32 %v1391, 1.0
  %v1394 = vrcp.pop %v1392
  %v1395 = vmul.f32 1.0, %v1394
  %v1396 = vrcp.pop %v1393
  %v1397 = vmul.f32 1.0, %v1396
  %v1398 = vmul.f32 %v1395, %v1381
  %v1399 = vadd.f32 %v1242, %v1398
  %v1400 = vtanh.pop %v1399
  %v1401 = vsub.f32 %v1238, %v1400
  %v1402 = vmul.f32 %v1397, %v1401
  %v1403 = vadd.f32 %v1400, %v1402
  %1404 = vst [vmem:[%s3] sm:$0xff] %v1403
  // Predicated region
  $region18: #{recurrent_encoder_forward.1} parent=0 // pred_check
    _
  $region19: #{recurrent_encoder_forward.1} parent=0 // pred_check_branch
    %1406 = sbr.rel (0) target = $region21
  $region20: #{recurrent_encoder_forward.1} parent=0 // pred_region
    _
  $region21: #{recurrent_encoder_forward.1} parent=0 // pred_fallthru
    _
  // Predicated region
  $region22: #{recurrent_encoder_forward.1} parent=0 // pred_check
    _
  $region23: #{recurrent_encoder_forward.1} parent=0 // pred_check_branch
    %1408 = sbr.rel (0) target = $region25
  $region24: #{recurrent_encoder_forward.1} parent=0 // pred_region
    _
  $region25: #{recurrent_encoder_forward.1} parent=0 // pred_fallthru
    _

</llo_original>
